<compile_context>
chip_gen: v7x
topology: tpu7x:2x2x1
jax: 0.10.0
libtpu: 0.0.40
codegen_flags: <defaults>
</compile_context>

<pallas_src>
import jax
import jax.numpy as jnp
from jax.experimental import pallas as pl
from jax.experimental.pallas import tpu as pltpu

_EPS = 1e-5  # torch.nn.InstanceNorm2d default


def get_padding(dilation, kernel_size):
    return round(dilation * (kernel_size - 1) / 2)


def _gelu_exact(x):
    # PyTorch nn.GELU(approximate='none'): 0.5*x*(1+erf(x/sqrt(2))).
    # erf via Abramowitz & Stegun 7.1.26 (|err| < 1.5e-7), exp-only.
    # The 1/(1+a*|z|) divide goes through the EUP (approx recip) with one
    # Newton refinement so accuracy stays ~f32 while freeing VALU slots.
    z = x * 0.7071067811865476
    za = jnp.abs(z)
    denom = 1.0 + 0.3275911 * za
    t = pl.reciprocal(denom, approx=True)
    t = t * (2.0 - denom * t)                       # one Newton step
    poly = t * (0.254829592 + t * (-0.284496736 + t * (1.421413741
             + t * (-1.453152027 + t * 1.061405429))))
    erf_abs = 1.0 - poly * jnp.exp(-za * za)
    erf = jnp.where(z >= 0.0, erf_abs, -erf_abs)
    return 0.5 * x * (1.0 + erf)


def _instance_norm(y):
    # y: (C, H*W) for one batch element; normalize each channel (row) over the
    # lane (spatial) axis with biased variance (InstanceNorm2d semantics).
    mean = jnp.mean(y, axis=1, keepdims=True)
    c = y - mean
    var = jnp.mean(c * c, axis=1, keepdims=True)
    return c * jax.lax.rsqrt(var + _EPS)


def _tap_table(k, d, p, W, HW):
    """Per conv tap: lane-roll amount + whether it is the (no-shift) center tap."""
    taps = []
    for kh in range(k):
        for kw in range(k):
            dy = kh * d - p
            dx = kw * d - p
            shift = (-(dy * W + dx)) % HW
            taps.append((shift, dy == 0 and dx == 0))
    return taps


def _build_masks(H, W, k, d, p):
    """(k*k, H*W) f32 masks: 1 where the shifted source pixel is in-bounds."""
    HW = H * W
    ys = jnp.arange(H)
    xs = jnp.arange(W)
    rows = []
    for kh in range(k):
        for kw in range(k):
            dy = kh * d - p
            dx = kw * d - p
            vy = (ys + dy >= 0) & (ys + dy < H)
            vx = (xs + dx >= 0) & (xs + dx < W)
            rows.append((vy[:, None] & vx[None, :]).reshape(HW))
    return jnp.stack(rows, axis=0).astype(jnp.float32)


def _make_kernel(C, HW, taps1, taps2, K1, K2):
    def kernel(x_ref, w1_ref, b1_ref, m1_ref, w2_ref, b2_ref, m2_ref,
               o_ref, p_ref):
        x = x_ref[0]                                  # (C, HW), lane-dense

        def build_patches(src, m_ref_, taps):
            # Fill p_ref[t*C:(t+1)*C, :] with the tap-t shifted/masked source.
            masks = m_ref_[...]                       # (k*k, HW), small
            for t, (shift, is_center) in enumerate(taps):
                if is_center:
                    val = src                         # no roll, mask == 1
                else:
                    val = pltpu.roll(src, shift, 1) * masks[t:t + 1, :]
                p_ref[t * C:(t + 1) * C, :] = val

        # ---------- conv1: one im2col matmul, K = k1*k1*C ----------
        build_patches(x, m1_ref, taps1)
        y1 = jnp.dot(w1_ref[...], p_ref[0:K1, :],
                     preferred_element_type=jnp.float32) + b1_ref[...]

        # ---------- InstanceNorm2d + GELU ----------
        h = _gelu_exact(_instance_norm(y1))

        # ---------- conv2: one im2col matmul, K = k2*k2*C ----------
        build_patches(h, m2_ref, taps2)
        y2 = jnp.dot(w2_ref[...], p_ref[0:K2, :],
                     preferred_element_type=jnp.float32) + b2_ref[...]

        # ---------- InstanceNorm2d, residual add, GELU ----------
        out = _gelu_exact(_instance_norm(y2) + x)
        o_ref[0] = out.astype(o_ref.dtype)            # lane-dense store (HW)

    return kernel


def resnet_block_forward(x_nchw, params, *, kernel_sizes, dilations):
    """Pallas forward. x_nchw: (N, C, H, W); params: (w1, b1, w2, b2) HWIO/1D."""
    k1, k2 = kernel_sizes
    d1, d2 = dilations
    p1 = get_padding(d1, k1)
    p2 = get_padding(d2, k2)
    if 2 * p1 != d1 * (k1 - 1) or 2 * p2 != d2 * (k2 - 1):
        # Asymmetric 'same' padding would change the spatial size and break the
        # residual add in the PyTorch module as well.
        raise NotImplementedError("odd d*(k-1) (asymmetric padding) unsupported")

    N, C, H, W = x_nchw.shape
    HW = H * W
    K1, K2 = k1 * k1 * C, k2 * k2 * C
    Kmax = max(K1, K2)

    x_flat = x_nchw.reshape(N, C, HW).astype(jnp.float32)   # contiguous, free
    w1, b1, w2, b2 = params
    # HWIO -> (Cout, k*k*Cin) so that conv == W_mat @ P with P rows t*C + ci.
    w1_mat = jnp.transpose(w1.reshape(k1 * k1, C, C), (2, 0, 1)).reshape(C, K1)
    w2_mat = jnp.transpose(w2.reshape(k2 * k2, C, C), (2, 0, 1)).reshape(C, K2)
    w1_mat = w1_mat.astype(jnp.float32)
    w2_mat = w2_mat.astype(jnp.float32)
    b1_c = b1.reshape(C, 1).astype(jnp.float32)
    b2_c = b2.reshape(C, 1).astype(jnp.float32)
    m1 = _build_masks(H, W, k1, d1, p1)                      # (k1*k1, HW)
    m2 = _build_masks(H, W, k2, d2, p2)                      # (k2*k2, HW)

    taps1 = _tap_table(k1, d1, p1, W, HW)
    taps2 = _tap_table(k2, d2, p2, W, HW)
    kernel = _make_kernel(C, HW, taps1, taps2, K1, K2)

    out_flat = pl.pallas_call(
        kernel,
        out_shape=jax.ShapeDtypeStruct((N, C, HW), jnp.float32),
        grid_spec=pltpu.PrefetchScalarGridSpec(
            num_scalar_prefetch=0,
            grid=(N,),                                       # one batch elem / step
            in_specs=[
                pl.BlockSpec((1, C, HW), lambda n: (n, 0, 0)),
                pl.BlockSpec((C, K1), lambda n: (0, 0)),
                pl.BlockSpec((C, 1), lambda n: (0, 0)),
                pl.BlockSpec((k1 * k1, HW), lambda n: (0, 0)),
                pl.BlockSpec((C, K2), lambda n: (0, 0)),
                pl.BlockSpec((C, 1), lambda n: (0, 0)),
                pl.BlockSpec((k2 * k2, HW), lambda n: (0, 0)),
            ],
            out_specs=pl.BlockSpec((1, C, HW), lambda n: (n, 0, 0)),
            scratch_shapes=[
                pltpu.VMEM((Kmax, HW), jnp.float32),         # shared im2col buffer
            ],
        ),
        compiler_params=pltpu.CompilerParams(
            dimension_semantics=("parallel",),               # batch -> megacore
            vmem_limit_bytes=32 * 1024 * 1024,
        ),
    )(x_flat, w1_mat, b1_c, m1, w2_mat, b2_c, m2)
    return out_flat.reshape(N, C, H, W)


# ---------------- pure-JAX reference (for correctness check) ----------------
def _ref_gelu(x):
    return 0.5 * x * (1.0 + jax.scipy.special.erf(x * 0.7071067811865476))


def _ref_inorm(x_nhwc):
    mean = jnp.mean(x_nhwc, axis=(1, 2), keepdims=True)
    var = jnp.mean((x_nhwc - mean) ** 2, axis=(1, 2), keepdims=True)
    return (x_nhwc - mean) / jnp.sqrt(var + _EPS)


def resnet_block_reference(x_nchw, params, *, kernel_sizes, dilations):
    k1, k2 = kernel_sizes
    d1, d2 = dilations
    p1 = get_padding(d1, k1)
    p2 = get_padding(d2, k2)
    w1, b1, w2, b2 = params
    x = jnp.transpose(x_nchw, (0, 2, 3, 1)).astype(jnp.float32)

    def conv(inp, w, b, d, p):
        y = jax.lax.conv_general_dilated(
            inp, w, window_strides=(1, 1), padding=[(p, p), (p, p)],
            rhs_dilation=(d, d), dimension_numbers=("NHWC", "HWIO", "NHWC"))
        return y + b[None, None, None, :]

    h = _ref_gelu(_ref_inorm(conv(x, w1, b1, d1, p1)))
    out = _ref_gelu(_ref_inorm(conv(h, w2, b2, d2, p2)) + x)
    return jnp.transpose(out, (0, 3, 1, 2))


if __name__ == "__main__":
    N, C, H, W = 2, 8, 16, 16
    kernel_sizes = (3, 5)
    dilations = (1, 2)

    key = jax.random.PRNGKey(0)
    kx, kw1, kb1, kw2, kb2 = jax.random.split(key, 5)
    x = jax.random.normal(kx, (N, C, H, W), jnp.float32)

    # Deterministic, PyTorch-like scale (uniform +- 1/sqrt(fan_in)).
    fan1 = float(C * kernel_sizes[0] ** 2) ** 0.5
    fan2 = float(C * kernel_sizes[1] ** 2) ** 0.5
    w1 = jax.random.uniform(kw1, (kernel_sizes[0], kernel_sizes[0], C, C),
                            jnp.float32, -1.0, 1.0) / fan1
    b1 = jax.random.uniform(kb1, (C,), jnp.float32, -1.0, 1.0) / fan1
    w2 = jax.random.uniform(kw2, (kernel_sizes[1], kernel_sizes[1], C, C),
                            jnp.float32, -1.0, 1.0) / fan2
    b2 = jax.random.uniform(kb2, (C,), jnp.float32, -1.0, 1.0) / fan2
    params = (w1, b1, w2, b2)

    out = resnet_block_forward(x, params, kernel_sizes=kernel_sizes,
                               dilations=dilations)
    out = jax.block_until_ready(out)

    ref = resnet_block_reference(x, params, kernel_sizes=kernel_sizes,
                                 dilations=dilations)
    assert out.shape == x.shape
    max_err = float(jnp.max(jnp.abs(out - ref)))
    assert jnp.allclose(out, ref, atol=1e-4, rtol=1e-4), f"max abs err {max_err}"
    print("KERNEL_OK")
</pallas_src>

<mosaic_0001>
module attributes {stable_mosaic.version = 11 : i64} {
  func.func @kernel(%arg0: i32, %arg1: memref<1x8x256xf32, #tpu.memory_space<vmem>>, %arg2: memref<8x72xf32, #tpu.memory_space<vmem>>, %arg3: memref<8x1xf32, #tpu.memory_space<vmem>>, %arg4: memref<9x256xf32, #tpu.memory_space<vmem>>, %arg5: memref<8x200xf32, #tpu.memory_space<vmem>>, %arg6: memref<8x1xf32, #tpu.memory_space<vmem>>, %arg7: memref<25x256xf32, #tpu.memory_space<vmem>>, %arg8: memref<1x8x256xf32, #tpu.memory_space<vmem>>, %arg9: memref<200x256xf32, #tpu.memory_space<vmem>>) attributes {dimension_semantics = [#tpu.dimension_semantics<parallel>], iteration_bounds = array<i64: 2>, scalar_prefetch = 0 : i64, scratch_operands = 1 : i64, tpu.core_type = #tpu.core_type<tc>, window_params = [{transform_indices = @transform_0, window_bounds = array<i64: 1, 8, 256>}, {pipeline_mode = #tpu.pipeline_mode<synchronous>, transform_indices = @transform_1, window_bounds = array<i64: 8, 72>}, {pipeline_mode = #tpu.pipeline_mode<synchronous>, transform_indices = @transform_2, window_bounds = array<i64: 8, 1>}, {pipeline_mode = #tpu.pipeline_mode<synchronous>, transform_indices = @transform_3, window_bounds = array<i64: 9, 256>}, {pipeline_mode = #tpu.pipeline_mode<synchronous>, transform_indices = @transform_4, window_bounds = array<i64: 8, 200>}, {pipeline_mode = #tpu.pipeline_mode<synchronous>, transform_indices = @transform_5, window_bounds = array<i64: 8, 1>}, {pipeline_mode = #tpu.pipeline_mode<synchronous>, transform_indices = @transform_6, window_bounds = array<i64: 25, 256>}, {transform_indices = @transform_7, window_bounds = array<i64: 1, 8, 256>}]} {
    %c0 = arith.constant 0 : index
    %c0_0 = arith.constant 0 : index
    %c0_1 = arith.constant 0 : index
    %0 = vector.load %arg1[%c0, %c0_0, %c0_1] : memref<1x8x256xf32, #tpu.memory_space<vmem>>, vector<1x8x256xf32>
    %1 = vector.shape_cast %0 : vector<1x8x256xf32> to vector<8x256xf32>
    %c0_2 = arith.constant 0 : index
    %c0_3 = arith.constant 0 : index
    %2 = vector.load %arg4[%c0_2, %c0_3] : memref<9x256xf32, #tpu.memory_space<vmem>>, vector<9x256xf32>
    %c17_i32 = arith.constant 17 : i32
    %3 = tpu.dynamic_rotate %1 by %c17_i32 dim 1 : vector<8x256xf32>, i32 -> vector<8x256xf32>
    %4 = vector.extract_strided_slice %2 {offsets = [0, 0], sizes = [1, 256], strides = [1, 1]} : vector<9x256xf32> to vector<1x256xf32>
    %5 = vector.broadcast %4 : vector<1x256xf32> to vector<8x256xf32>
    %6 = arith.mulf %3, %5 : vector<8x256xf32>
    %c0_4 = arith.constant 0 : index
    %c0_5 = arith.constant 0 : index
    %7 = vector.load %arg9[%c0_4, %c0_5] : memref<200x256xf32, #tpu.memory_space<vmem>>, vector<8x256xf32>
    tpu.vector_store %arg9[%c0_4, %c0_5], %6 {strides = array<i32>} : memref<200x256xf32, #tpu.memory_space<vmem>>, vector<8x256xf32>,
    %c16_i32 = arith.constant 16 : i32
    %8 = tpu.dynamic_rotate %1 by %c16_i32 dim 1 : vector<8x256xf32>, i32 -> vector<8x256xf32>
    %9 = vector.extract_strided_slice %2 {offsets = [1, 0], sizes = [1, 256], strides = [1, 1]} : vector<9x256xf32> to vector<1x256xf32>
    %10 = vector.broadcast %9 : vector<1x256xf32> to vector<8x256xf32>
    %11 = arith.mulf %8, %10 : vector<8x256xf32>
    %c8 = arith.constant 8 : index
    %c0_6 = arith.constant 0 : index
    %12 = vector.load %arg9[%c8, %c0_6] : memref<200x256xf32, #tpu.memory_space<vmem>>, vector<8x256xf32>
    tpu.vector_store %arg9[%c8, %c0_6], %11 {strides = array<i32>} : memref<200x256xf32, #tpu.memory_space<vmem>>, vector<8x256xf32>,
    %c15_i32 = arith.constant 15 : i32
    %13 = tpu.dynamic_rotate %1 by %c15_i32 dim 1 : vector<8x256xf32>, i32 -> vector<8x256xf32>
    %14 = vector.extract_strided_slice %2 {offsets = [2, 0], sizes = [1, 256], strides = [1, 1]} : vector<9x256xf32> to vector<1x256xf32>
    %15 = vector.broadcast %14 : vector<1x256xf32> to vector<8x256xf32>
    %16 = arith.mulf %13, %15 : vector<8x256xf32>
    %c16 = arith.constant 16 : index
    %c0_7 = arith.constant 0 : index
    %17 = vector.load %arg9[%c16, %c0_7] : memref<200x256xf32, #tpu.memory_space<vmem>>, vector<8x256xf32>
    tpu.vector_store %arg9[%c16, %c0_7], %16 {strides = array<i32>} : memref<200x256xf32, #tpu.memory_space<vmem>>, vector<8x256xf32>,
    %c1_i32 = arith.constant 1 : i32
    %18 = tpu.dynamic_rotate %1 by %c1_i32 dim 1 : vector<8x256xf32>, i32 -> vector<8x256xf32>
    %19 = vector.extract_strided_slice %2 {offsets = [3, 0], sizes = [1, 256], strides = [1, 1]} : vector<9x256xf32> to vector<1x256xf32>
    %20 = vector.broadcast %19 : vector<1x256xf32> to vector<8x256xf32>
    %21 = arith.mulf %18, %20 : vector<8x256xf32>
    %c24 = arith.constant 24 : index
    %c0_8 = arith.constant 0 : index
    %22 = vector.load %arg9[%c24, %c0_8] : memref<200x256xf32, #tpu.memory_space<vmem>>, vector<8x256xf32>
    tpu.vector_store %arg9[%c24, %c0_8], %21 {strides = array<i32>} : memref<200x256xf32, #tpu.memory_space<vmem>>, vector<8x256xf32>,
    %c32 = arith.constant 32 : index
    %c0_9 = arith.constant 0 : index
    %23 = vector.load %arg9[%c32, %c0_9] : memref<200x256xf32, #tpu.memory_space<vmem>>, vector<8x256xf32>
    tpu.vector_store %arg9[%c32, %c0_9], %1 {strides = array<i32>} : memref<200x256xf32, #tpu.memory_space<vmem>>, vector<8x256xf32>,
    %c255_i32 = arith.constant 255 : i32
    %24 = tpu.dynamic_rotate %1 by %c255_i32 dim 1 : vector<8x256xf32>, i32 -> vector<8x256xf32>
    %25 = vector.extract_strided_slice %2 {offsets = [5, 0], sizes = [1, 256], strides = [1, 1]} : vector<9x256xf32> to vector<1x256xf32>
    %26 = vector.broadcast %25 : vector<1x256xf32> to vector<8x256xf32>
    %27 = arith.mulf %24, %26 : vector<8x256xf32>
    %c40 = arith.constant 40 : index
    %c0_10 = arith.constant 0 : index
    %28 = vector.load %arg9[%c40, %c0_10] : memref<200x256xf32, #tpu.memory_space<vmem>>, vector<8x256xf32>
    tpu.vector_store %arg9[%c40, %c0_10], %27 {strides = array<i32>} : memref<200x256xf32, #tpu.memory_space<vmem>>, vector<8x256xf32>,
    %c241_i32 = arith.constant 241 : i32
    %29 = tpu.dynamic_rotate %1 by %c241_i32 dim 1 : vector<8x256xf32>, i32 -> vector<8x256xf32>
    %30 = vector.extract_strided_slice %2 {offsets = [6, 0], sizes = [1, 256], strides = [1, 1]} : vector<9x256xf32> to vector<1x256xf32>
    %31 = vector.broadcast %30 : vector<1x256xf32> to vector<8x256xf32>
    %32 = arith.mulf %29, %31 : vector<8x256xf32>
    %c48 = arith.constant 48 : index
    %c0_11 = arith.constant 0 : index
    %33 = vector.load %arg9[%c48, %c0_11] : memref<200x256xf32, #tpu.memory_space<vmem>>, vector<8x256xf32>
    tpu.vector_store %arg9[%c48, %c0_11], %32 {strides = array<i32>} : memref<200x256xf32, #tpu.memory_space<vmem>>, vector<8x256xf32>,
    %c240_i32 = arith.constant 240 : i32
    %34 = tpu.dynamic_rotate %1 by %c240_i32 dim 1 : vector<8x256xf32>, i32 -> vector<8x256xf32>
    %35 = vector.extract_strided_slice %2 {offsets = [7, 0], sizes = [1, 256], strides = [1, 1]} : vector<9x256xf32> to vector<1x256xf32>
    %36 = vector.broadcast %35 : vector<1x256xf32> to vector<8x256xf32>
    %37 = arith.mulf %34, %36 : vector<8x256xf32>
    %c56 = arith.constant 56 : index
    %c0_12 = arith.constant 0 : index
    %38 = vector.load %arg9[%c56, %c0_12] : memref<200x256xf32, #tpu.memory_space<vmem>>, vector<8x256xf32>
    tpu.vector_store %arg9[%c56, %c0_12], %37 {strides = array<i32>} : memref<200x256xf32, #tpu.memory_space<vmem>>, vector<8x256xf32>,
    %c239_i32 = arith.constant 239 : i32
    %39 = tpu.dynamic_rotate %1 by %c239_i32 dim 1 : vector<8x256xf32>, i32 -> vector<8x256xf32>
    %40 = vector.extract_strided_slice %2 {offsets = [8, 0], sizes = [1, 256], strides = [1, 1]} : vector<9x256xf32> to vector<1x256xf32>
    %41 = vector.broadcast %40 : vector<1x256xf32> to vector<8x256xf32>
    %42 = arith.mulf %39, %41 : vector<8x256xf32>
    %c64 = arith.constant 64 : index
    %c0_13 = arith.constant 0 : index
    %43 = vector.load %arg9[%c64, %c0_13] : memref<200x256xf32, #tpu.memory_space<vmem>>, vector<8x256xf32>
    tpu.vector_store %arg9[%c64, %c0_13], %42 {strides = array<i32>} : memref<200x256xf32, #tpu.memory_space<vmem>>, vector<8x256xf32>,
    %c0_14 = arith.constant 0 : index
    %c0_15 = arith.constant 0 : index
    %44 = vector.load %arg2[%c0_14, %c0_15] : memref<8x72xf32, #tpu.memory_space<vmem>>, vector<8x72xf32>
    %c0_16 = arith.constant 0 : index
    %c0_17 = arith.constant 0 : index
    %45 = vector.load %arg9[%c0_16, %c0_17] : memref<200x256xf32, #tpu.memory_space<vmem>>, vector<72x256xf32>
    %cst = arith.constant dense<0.000000e+00> : vector<8x256xf32>
    %46 = tpu.matmul %44, %45, %cst {dimension_numbers = #tpu.dot_dimension_numbers<[1], [0], [0], [1], [0, 0, 1, 1], [], []>} : vector<8x72xf32>, vector<72x256xf32>, vector<8x256xf32> -> vector<8x256xf32>
    %c0_18 = arith.constant 0 : index
    %c0_19 = arith.constant 0 : index
    %47 = vector.load %arg3[%c0_18, %c0_19] : memref<8x1xf32, #tpu.memory_space<vmem>>, vector<8x1xf32>
    %48 = vector.broadcast %47 : vector<8x1xf32> to vector<8x256xf32>
    %49 = arith.addf %46, %48 : vector<8x256xf32>
    %cst_20 = arith.constant dense<0.000000e+00> : vector<8xf32>
    %50 = vector.multi_reduction <add>, %49, %cst_20 [1] : vector<8x256xf32> to vector<8xf32>
    %51 = vector.shape_cast %50 : vector<8xf32> to vector<8x1xf32>
    %cst_21 = arith.constant 2.560000e+02 : f32
    %52 = vector.broadcast %cst_21 : f32 to vector<8x1xf32>
    %53 = arith.divf %51, %52 : vector<8x1xf32>
    %54 = vector.broadcast %53 : vector<8x1xf32> to vector<8x256xf32>
    %55 = arith.subf %49, %54 : vector<8x256xf32>
    %56 = arith.mulf %55, %55 : vector<8x256xf32>
    %cst_22 = arith.constant dense<0.000000e+00> : vector<8xf32>
    %57 = vector.multi_reduction <add>, %56, %cst_22 [1] : vector<8x256xf32> to vector<8xf32>
    %58 = vector.shape_cast %57 : vector<8xf32> to vector<8x1xf32>
    %cst_23 = arith.constant 2.560000e+02 : f32
    %59 = vector.broadcast %cst_23 : f32 to vector<8x1xf32>
    %60 = arith.divf %58, %59 : vector<8x1xf32>
    %cst_24 = arith.constant 9.99999974E-6 : f32
    %61 = vector.broadcast %cst_24 : f32 to vector<8x1xf32>
    %62 = arith.addf %60, %61 : vector<8x1xf32>
    %63 = math.rsqrt %62 : vector<8x1xf32>
    %64 = vector.broadcast %63 : vector<8x1xf32> to vector<8x256xf32>
    %65 = arith.mulf %55, %64 : vector<8x256xf32>
    %cst_25 = arith.constant 0.707106769 : f32
    %66 = vector.broadcast %cst_25 : f32 to vector<8x256xf32>
    %67 = arith.mulf %65, %66 : vector<8x256xf32>
    %68 = math.absf %67 : vector<8x256xf32>
    %cst_26 = arith.constant 0.327591091 : f32
    %69 = vector.broadcast %cst_26 : f32 to vector<8x256xf32>
    %70 = arith.mulf %69, %68 : vector<8x256xf32>
    %cst_27 = arith.constant 1.000000e+00 : f32
    %71 = vector.broadcast %cst_27 : f32 to vector<8x256xf32>
    %72 = arith.addf %71, %70 : vector<8x256xf32>
    %73 = tpu.reciprocal %72 {approx = true} : vector<8x256xf32> -> vector<8x256xf32>
    %74 = arith.mulf %72, %73 : vector<8x256xf32>
    %cst_28 = arith.constant 2.000000e+00 : f32
    %75 = vector.broadcast %cst_28 : f32 to vector<8x256xf32>
    %76 = arith.subf %75, %74 : vector<8x256xf32>
    %77 = arith.mulf %73, %76 : vector<8x256xf32>
    %cst_29 = arith.constant 1.06140542 : f32
    %78 = vector.broadcast %cst_29 : f32 to vector<8x256xf32>
    %79 = arith.mulf %77, %78 : vector<8x256xf32>
    %cst_30 = arith.constant -1.45315206 : f32
    %80 = vector.broadcast %cst_30 : f32 to vector<8x256xf32>
    %81 = arith.addf %80, %79 : vector<8x256xf32>
    %82 = arith.mulf %77, %81 : vector<8x256xf32>
    %cst_31 = arith.constant 1.42141378 : f32
    %83 = vector.broadcast %cst_31 : f32 to vector<8x256xf32>
    %84 = arith.addf %83, %82 : vector<8x256xf32>
    %85 = arith.mulf %77, %84 : vector<8x256xf32>
    %cst_32 = arith.constant -0.284496725 : f32
    %86 = vector.broadcast %cst_32 : f32 to vector<8x256xf32>
    %87 = arith.addf %86, %85 : vector<8x256xf32>
    %88 = arith.mulf %77, %87 : vector<8x256xf32>
    %cst_33 = arith.constant 0.254829586 : f32
    %89 = vector.broadcast %cst_33 : f32 to vector<8x256xf32>
    %90 = arith.addf %89, %88 : vector<8x256xf32>
    %91 = arith.mulf %77, %90 : vector<8x256xf32>
    %cst_34 = arith.constant 0.000000e+00 : f32
    %92 = vector.broadcast %cst_34 : f32 to vector<8x256xf32>
    %93 = arith.subf %92, %68 : vector<8x256xf32>
    %94 = arith.mulf %93, %68 : vector<8x256xf32>
    %95 = math.exp %94 : vector<8x256xf32>
    %96 = arith.mulf %91, %95 : vector<8x256xf32>
    %cst_35 = arith.constant 1.000000e+00 : f32
    %97 = vector.broadcast %cst_35 : f32 to vector<8x256xf32>
    %98 = arith.subf %97, %96 : vector<8x256xf32>
    %cst_36 = arith.constant 0.000000e+00 : f32
    %99 = vector.broadcast %cst_36 : f32 to vector<8x256xf32>
    %100 = arith.cmpf oge, %67, %99 : vector<8x256xf32>
    %cst_37 = arith.constant 0.000000e+00 : f32
    %101 = vector.broadcast %cst_37 : f32 to vector<8x256xf32>
    %102 = arith.subf %101, %98 : vector<8x256xf32>
    %103 = arith.select %100, %98, %102 : vector<8x256xi1>, vector<8x256xf32>
    %cst_38 = arith.constant 5.000000e-01 : f32
    %104 = vector.broadcast %cst_38 : f32 to vector<8x256xf32>
    %105 = arith.mulf %104, %65 : vector<8x256xf32>
    %cst_39 = arith.constant 1.000000e+00 : f32
    %106 = vector.broadcast %cst_39 : f32 to vector<8x256xf32>
    %107 = arith.addf %106, %103 : vector<8x256xf32>
    %108 = arith.mulf %105, %107 : vector<8x256xf32>
    %c0_40 = arith.constant 0 : index
    %c0_41 = arith.constant 0 : index
    %109 = vector.load %arg7[%c0_40, %c0_41] : memref<25x256xf32, #tpu.memory_space<vmem>>, vector<25x256xf32>
    %c68_i32 = arith.constant 68 : i32
    %110 = tpu.dynamic_rotate %108 by %c68_i32 dim 1 : vector<8x256xf32>, i32 -> vector<8x256xf32>
    %111 = vector.extract_strided_slice %109 {offsets = [0, 0], sizes = [1, 256], strides = [1, 1]} : vector<25x256xf32> to vector<1x256xf32>
    %112 = vector.broadcast %111 : vector<1x256xf32> to vector<8x256xf32>
    %113 = arith.mulf %110, %112 : vector<8x256xf32>
    %c0_42 = arith.constant 0 : index
    %c0_43 = arith.constant 0 : index
    %114 = vector.load %arg9[%c0_42, %c0_43] : memref<200x256xf32, #tpu.memory_space<vmem>>, vector<8x256xf32>
    tpu.vector_store %arg9[%c0_42, %c0_43], %113 {strides = array<i32>} : memref<200x256xf32, #tpu.memory_space<vmem>>, vector<8x256xf32>,
    %c66_i32 = arith.constant 66 : i32
    %115 = tpu.dynamic_rotate %108 by %c66_i32 dim 1 : vector<8x256xf32>, i32 -> vector<8x256xf32>
    %116 = vector.extract_strided_slice %109 {offsets = [1, 0], sizes = [1, 256], strides = [1, 1]} : vector<25x256xf32> to vector<1x256xf32>
    %117 = vector.broadcast %116 : vector<1x256xf32> to vector<8x256xf32>
    %118 = arith.mulf %115, %117 : vector<8x256xf32>
    %c8_44 = arith.constant 8 : index
    %c0_45 = arith.constant 0 : index
    %119 = vector.load %arg9[%c8_44, %c0_45] : memref<200x256xf32, #tpu.memory_space<vmem>>, vector<8x256xf32>
    tpu.vector_store %arg9[%c8_44, %c0_45], %118 {strides = array<i32>} : memref<200x256xf32, #tpu.memory_space<vmem>>, vector<8x256xf32>,
    %c64_i32 = arith.constant 64 : i32
    %120 = tpu.dynamic_rotate %108 by %c64_i32 dim 1 : vector<8x256xf32>, i32 -> vector<8x256xf32>
    %121 = vector.extract_strided_slice %109 {offsets = [2, 0], sizes = [1, 256], strides = [1, 1]} : vector<25x256xf32> to vector<1x256xf32>
    %122 = vector.broadcast %121 : vector<1x256xf32> to vector<8x256xf32>
    %123 = arith.mulf %120, %122 : vector<8x256xf32>
    %c16_46 = arith.constant 16 : index
    %c0_47 = arith.constant 0 : index
    %124 = vector.load %arg9[%c16_46, %c0_47] : memref<200x256xf32, #tpu.memory_space<vmem>>, vector<8x256xf32>
    tpu.vector_store %arg9[%c16_46, %c0_47], %123 {strides = array<i32>} : memref<200x256xf32, #tpu.memory_space<vmem>>, vector<8x256xf32>,
    %c62_i32 = arith.constant 62 : i32
    %125 = tpu.dynamic_rotate %108 by %c62_i32 dim 1 : vector<8x256xf32>, i32 -> vector<8x256xf32>
    %126 = vector.extract_strided_slice %109 {offsets = [3, 0], sizes = [1, 256], strides = [1, 1]} : vector<25x256xf32> to vector<1x256xf32>
    %127 = vector.broadcast %126 : vector<1x256xf32> to vector<8x256xf32>
    %128 = arith.mulf %125, %127 : vector<8x256xf32>
    %c24_48 = arith.constant 24 : index
    %c0_49 = arith.constant 0 : index
    %129 = vector.load %arg9[%c24_48, %c0_49] : memref<200x256xf32, #tpu.memory_space<vmem>>, vector<8x256xf32>
    tpu.vector_store %arg9[%c24_48, %c0_49], %128 {strides = array<i32>} : memref<200x256xf32, #tpu.memory_space<vmem>>, vector<8x256xf32>,
    %c60_i32 = arith.constant 60 : i32
    %130 = tpu.dynamic_rotate %108 by %c60_i32 dim 1 : vector<8x256xf32>, i32 -> vector<8x256xf32>
    %131 = vector.extract_strided_slice %109 {offsets = [4, 0], sizes = [1, 256], strides = [1, 1]} : vector<25x256xf32> to vector<1x256xf32>
    %132 = vector.broadcast %131 : vector<1x256xf32> to vector<8x256xf32>
    %133 = arith.mulf %130, %132 : vector<8x256xf32>
    %c32_50 = arith.constant 32 : index
    %c0_51 = arith.constant 0 : index
    %134 = vector.load %arg9[%c32_50, %c0_51] : memref<200x256xf32, #tpu.memory_space<vmem>>, vector<8x256xf32>
    tpu.vector_store %arg9[%c32_50, %c0_51], %133 {strides = array<i32>} : memref<200x256xf32, #tpu.memory_space<vmem>>, vector<8x256xf32>,
    %c36_i32 = arith.constant 36 : i32
    %135 = tpu.dynamic_rotate %108 by %c36_i32 dim 1 : vector<8x256xf32>, i32 -> vector<8x256xf32>
    %136 = vector.extract_strided_slice %109 {offsets = [5, 0], sizes = [1, 256], strides = [1, 1]} : vector<25x256xf32> to vector<1x256xf32>
    %137 = vector.broadcast %136 : vector<1x256xf32> to vector<8x256xf32>
    %138 = arith.mulf %135, %137 : vector<8x256xf32>
    %c40_52 = arith.constant 40 : index
    %c0_53 = arith.constant 0 : index
    %139 = vector.load %arg9[%c40_52, %c0_53] : memref<200x256xf32, #tpu.memory_space<vmem>>, vector<8x256xf32>
    tpu.vector_store %arg9[%c40_52, %c0_53], %138 {strides = array<i32>} : memref<200x256xf32, #tpu.memory_space<vmem>>, vector<8x256xf32>,
    %c34_i32 = arith.constant 34 : i32
    %140 = tpu.dynamic_rotate %108 by %c34_i32 dim 1 : vector<8x256xf32>, i32 -> vector<8x256xf32>
    %141 = vector.extract_strided_slice %109 {offsets = [6, 0], sizes = [1, 256], strides = [1, 1]} : vector<25x256xf32> to vector<1x256xf32>
    %142 = vector.broadcast %141 : vector<1x256xf32> to vector<8x256xf32>
    %143 = arith.mulf %140, %142 : vector<8x256xf32>
    %c48_54 = arith.constant 48 : index
    %c0_55 = arith.constant 0 : index
    %144 = vector.load %arg9[%c48_54, %c0_55] : memref<200x256xf32, #tpu.memory_space<vmem>>, vector<8x256xf32>
    tpu.vector_store %arg9[%c48_54, %c0_55], %143 {strides = array<i32>} : memref<200x256xf32, #tpu.memory_space<vmem>>, vector<8x256xf32>,
    %c32_i32 = arith.constant 32 : i32
    %145 = tpu.dynamic_rotate %108 by %c32_i32 dim 1 : vector<8x256xf32>, i32 -> vector<8x256xf32>
    %146 = vector.extract_strided_slice %109 {offsets = [7, 0], sizes = [1, 256], strides = [1, 1]} : vector<25x256xf32> to vector<1x256xf32>
    %147 = vector.broadcast %146 : vector<1x256xf32> to vector<8x256xf32>
    %148 = arith.mulf %145, %147 : vector<8x256xf32>
    %c56_56 = arith.constant 56 : index
    %c0_57 = arith.constant 0 : index
    %149 = vector.load %arg9[%c56_56, %c0_57] : memref<200x256xf32, #tpu.memory_space<vmem>>, vector<8x256xf32>
    tpu.vector_store %arg9[%c56_56, %c0_57], %148 {strides = array<i32>} : memref<200x256xf32, #tpu.memory_space<vmem>>, vector<8x256xf32>,
    %c30_i32 = arith.constant 30 : i32
    %150 = tpu.dynamic_rotate %108 by %c30_i32 dim 1 : vector<8x256xf32>, i32 -> vector<8x256xf32>
    %151 = vector.extract_strided_slice %109 {offsets = [8, 0], sizes = [1, 256], strides = [1, 1]} : vector<25x256xf32> to vector<1x256xf32>
    %152 = vector.broadcast %151 : vector<1x256xf32> to vector<8x256xf32>
    %153 = arith.mulf %150, %152 : vector<8x256xf32>
    %c64_58 = arith.constant 64 : index
    %c0_59 = arith.constant 0 : index
    %154 = vector.load %arg9[%c64_58, %c0_59] : memref<200x256xf32, #tpu.memory_space<vmem>>, vector<8x256xf32>
    tpu.vector_store %arg9[%c64_58, %c0_59], %153 {strides = array<i32>} : memref<200x256xf32, #tpu.memory_space<vmem>>, vector<8x256xf32>,
    %c28_i32 = arith.constant 28 : i32
    %155 = tpu.dynamic_rotate %108 by %c28_i32 dim 1 : vector<8x256xf32>, i32 -> vector<8x256xf32>
    %156 = vector.extract_strided_slice %109 {offsets = [9, 0], sizes = [1, 256], strides = [1, 1]} : vector<25x256xf32> to vector<1x256xf32>
    %157 = vector.broadcast %156 : vector<1x256xf32> to vector<8x256xf32>
    %158 = arith.mulf %155, %157 : vector<8x256xf32>
    %c72 = arith.constant 72 : index
    %c0_60 = arith.constant 0 : index
    %159 = vector.load %arg9[%c72, %c0_60] : memref<200x256xf32, #tpu.memory_space<vmem>>, vector<8x256xf32>
    tpu.vector_store %arg9[%c72, %c0_60], %158 {strides = array<i32>} : memref<200x256xf32, #tpu.memory_space<vmem>>, vector<8x256xf32>,
    %c4_i32 = arith.constant 4 : i32
    %160 = tpu.dynamic_rotate %108 by %c4_i32 dim 1 : vector<8x256xf32>, i32 -> vector<8x256xf32>
    %161 = vector.extract_strided_slice %109 {offsets = [10, 0], sizes = [1, 256], strides = [1, 1]} : vector<25x256xf32> to vector<1x256xf32>
    %162 = vector.broadcast %161 : vector<1x256xf32> to vector<8x256xf32>
    %163 = arith.mulf %160, %162 : vector<8x256xf32>
    %c80 = arith.constant 80 : index
    %c0_61 = arith.constant 0 : index
    %164 = vector.load %arg9[%c80, %c0_61] : memref<200x256xf32, #tpu.memory_space<vmem>>, vector<8x256xf32>
    tpu.vector_store %arg9[%c80, %c0_61], %163 {strides = array<i32>} : memref<200x256xf32, #tpu.memory_space<vmem>>, vector<8x256xf32>,
    %c2_i32 = arith.constant 2 : i32
    %165 = tpu.dynamic_rotate %108 by %c2_i32 dim 1 : vector<8x256xf32>, i32 -> vector<8x256xf32>
    %166 = vector.extract_strided_slice %109 {offsets = [11, 0], sizes = [1, 256], strides = [1, 1]} : vector<25x256xf32> to vector<1x256xf32>
    %167 = vector.broadcast %166 : vector<1x256xf32> to vector<8x256xf32>
    %168 = arith.mulf %165, %167 : vector<8x256xf32>
    %c88 = arith.constant 88 : index
    %c0_62 = arith.constant 0 : index
    %169 = vector.load %arg9[%c88, %c0_62] : memref<200x256xf32, #tpu.memory_space<vmem>>, vector<8x256xf32>
    tpu.vector_store %arg9[%c88, %c0_62], %168 {strides = array<i32>} : memref<200x256xf32, #tpu.memory_space<vmem>>, vector<8x256xf32>,
    %c96 = arith.constant 96 : index
    %c0_63 = arith.constant 0 : index
    %170 = vector.load %arg9[%c96, %c0_63] : memref<200x256xf32, #tpu.memory_space<vmem>>, vector<8x256xf32>
    tpu.vector_store %arg9[%c96, %c0_63], %108 {strides = array<i32>} : memref<200x256xf32, #tpu.memory_space<vmem>>, vector<8x256xf32>,
    %c254_i32 = arith.constant 254 : i32
    %171 = tpu.dynamic_rotate %108 by %c254_i32 dim 1 : vector<8x256xf32>, i32 -> vector<8x256xf32>
    %172 = vector.extract_strided_slice %109 {offsets = [13, 0], sizes = [1, 256], strides = [1, 1]} : vector<25x256xf32> to vector<1x256xf32>
    %173 = vector.broadcast %172 : vector<1x256xf32> to vector<8x256xf32>
    %174 = arith.mulf %171, %173 : vector<8x256xf32>
    %c104 = arith.constant 104 : index
    %c0_64 = arith.constant 0 : index
    %175 = vector.load %arg9[%c104, %c0_64] : memref<200x256xf32, #tpu.memory_space<vmem>>, vector<8x256xf32>
    tpu.vector_store %arg9[%c104, %c0_64], %174 {strides = array<i32>} : memref<200x256xf32, #tpu.memory_space<vmem>>, vector<8x256xf32>,
    %c252_i32 = arith.constant 252 : i32
    %176 = tpu.dynamic_rotate %108 by %c252_i32 dim 1 : vector<8x256xf32>, i32 -> vector<8x256xf32>
    %177 = vector.extract_strided_slice %109 {offsets = [14, 0], sizes = [1, 256], strides = [1, 1]} : vector<25x256xf32> to vector<1x256xf32>
    %178 = vector.broadcast %177 : vector<1x256xf32> to vector<8x256xf32>
    %179 = arith.mulf %176, %178 : vector<8x256xf32>
    %c112 = arith.constant 112 : index
    %c0_65 = arith.constant 0 : index
    %180 = vector.load %arg9[%c112, %c0_65] : memref<200x256xf32, #tpu.memory_space<vmem>>, vector<8x256xf32>
    tpu.vector_store %arg9[%c112, %c0_65], %179 {strides = array<i32>} : memref<200x256xf32, #tpu.memory_space<vmem>>, vector<8x256xf32>,
    %c228_i32 = arith.constant 228 : i32
    %181 = tpu.dynamic_rotate %108 by %c228_i32 dim 1 : vector<8x256xf32>, i32 -> vector<8x256xf32>
    %182 = vector.extract_strided_slice %109 {offsets = [15, 0], sizes = [1, 256], strides = [1, 1]} : vector<25x256xf32> to vector<1x256xf32>
    %183 = vector.broadcast %182 : vector<1x256xf32> to vector<8x256xf32>
    %184 = arith.mulf %181, %183 : vector<8x256xf32>
    %c120 = arith.constant 120 : index
    %c0_66 = arith.constant 0 : index
    %185 = vector.load %arg9[%c120, %c0_66] : memref<200x256xf32, #tpu.memory_space<vmem>>, vector<8x256xf32>
    tpu.vector_store %arg9[%c120, %c0_66], %184 {strides = array<i32>} : memref<200x256xf32, #tpu.memory_space<vmem>>, vector<8x256xf32>,
    %c226_i32 = arith.constant 226 : i32
    %186 = tpu.dynamic_rotate %108 by %c226_i32 dim 1 : vector<8x256xf32>, i32 -> vector<8x256xf32>
    %187 = vector.extract_strided_slice %109 {offsets = [16, 0], sizes = [1, 256], strides = [1, 1]} : vector<25x256xf32> to vector<1x256xf32>
    %188 = vector.broadcast %187 : vector<1x256xf32> to vector<8x256xf32>
    %189 = arith.mulf %186, %188 : vector<8x256xf32>
    %c128 = arith.constant 128 : index
    %c0_67 = arith.constant 0 : index
    %190 = vector.load %arg9[%c128, %c0_67] : memref<200x256xf32, #tpu.memory_space<vmem>>, vector<8x256xf32>
    tpu.vector_store %arg9[%c128, %c0_67], %189 {strides = array<i32>} : memref<200x256xf32, #tpu.memory_space<vmem>>, vector<8x256xf32>,
    %c224_i32 = arith.constant 224 : i32
    %191 = tpu.dynamic_rotate %108 by %c224_i32 dim 1 : vector<8x256xf32>, i32 -> vector<8x256xf32>
    %192 = vector.extract_strided_slice %109 {offsets = [17, 0], sizes = [1, 256], strides = [1, 1]} : vector<25x256xf32> to vector<1x256xf32>
    %193 = vector.broadcast %192 : vector<1x256xf32> to vector<8x256xf32>
    %194 = arith.mulf %191, %193 : vector<8x256xf32>
    %c136 = arith.constant 136 : index
    %c0_68 = arith.constant 0 : index
    %195 = vector.load %arg9[%c136, %c0_68] : memref<200x256xf32, #tpu.memory_space<vmem>>, vector<8x256xf32>
    tpu.vector_store %arg9[%c136, %c0_68], %194 {strides = array<i32>} : memref<200x256xf32, #tpu.memory_space<vmem>>, vector<8x256xf32>,
    %c222_i32 = arith.constant 222 : i32
    %196 = tpu.dynamic_rotate %108 by %c222_i32 dim 1 : vector<8x256xf32>, i32 -> vector<8x256xf32>
    %197 = vector.extract_strided_slice %109 {offsets = [18, 0], sizes = [1, 256], strides = [1, 1]} : vector<25x256xf32> to vector<1x256xf32>
    %198 = vector.broadcast %197 : vector<1x256xf32> to vector<8x256xf32>
    %199 = arith.mulf %196, %198 : vector<8x256xf32>
    %c144 = arith.constant 144 : index
    %c0_69 = arith.constant 0 : index
    %200 = vector.load %arg9[%c144, %c0_69] : memref<200x256xf32, #tpu.memory_space<vmem>>, vector<8x256xf32>
    tpu.vector_store %arg9[%c144, %c0_69], %199 {strides = array<i32>} : memref<200x256xf32, #tpu.memory_space<vmem>>, vector<8x256xf32>,
    %c220_i32 = arith.constant 220 : i32
    %201 = tpu.dynamic_rotate %108 by %c220_i32 dim 1 : vector<8x256xf32>, i32 -> vector<8x256xf32>
    %202 = vector.extract_strided_slice %109 {offsets = [19, 0], sizes = [1, 256], strides = [1, 1]} : vector<25x256xf32> to vector<1x256xf32>
    %203 = vector.broadcast %202 : vector<1x256xf32> to vector<8x256xf32>
    %204 = arith.mulf %201, %203 : vector<8x256xf32>
    %c152 = arith.constant 152 : index
    %c0_70 = arith.constant 0 : index
    %205 = vector.load %arg9[%c152, %c0_70] : memref<200x256xf32, #tpu.memory_space<vmem>>, vector<8x256xf32>
    tpu.vector_store %arg9[%c152, %c0_70], %204 {strides = array<i32>} : memref<200x256xf32, #tpu.memory_space<vmem>>, vector<8x256xf32>,
    %c196_i32 = arith.constant 196 : i32
    %206 = tpu.dynamic_rotate %108 by %c196_i32 dim 1 : vector<8x256xf32>, i32 -> vector<8x256xf32>
    %207 = vector.extract_strided_slice %109 {offsets = [20, 0], sizes = [1, 256], strides = [1, 1]} : vector<25x256xf32> to vector<1x256xf32>
    %208 = vector.broadcast %207 : vector<1x256xf32> to vector<8x256xf32>
    %209 = arith.mulf %206, %208 : vector<8x256xf32>
    %c160 = arith.constant 160 : index
    %c0_71 = arith.constant 0 : index
    %210 = vector.load %arg9[%c160, %c0_71] : memref<200x256xf32, #tpu.memory_space<vmem>>, vector<8x256xf32>
    tpu.vector_store %arg9[%c160, %c0_71], %209 {strides = array<i32>} : memref<200x256xf32, #tpu.memory_space<vmem>>, vector<8x256xf32>,
    %c194_i32 = arith.constant 194 : i32
    %211 = tpu.dynamic_rotate %108 by %c194_i32 dim 1 : vector<8x256xf32>, i32 -> vector<8x256xf32>
    %212 = vector.extract_strided_slice %109 {offsets = [21, 0], sizes = [1, 256], strides = [1, 1]} : vector<25x256xf32> to vector<1x256xf32>
    %213 = vector.broadcast %212 : vector<1x256xf32> to vector<8x256xf32>
    %214 = arith.mulf %211, %213 : vector<8x256xf32>
    %c168 = arith.constant 168 : index
    %c0_72 = arith.constant 0 : index
    %215 = vector.load %arg9[%c168, %c0_72] : memref<200x256xf32, #tpu.memory_space<vmem>>, vector<8x256xf32>
    tpu.vector_store %arg9[%c168, %c0_72], %214 {strides = array<i32>} : memref<200x256xf32, #tpu.memory_space<vmem>>, vector<8x256xf32>,
    %c192_i32 = arith.constant 192 : i32
    %216 = tpu.dynamic_rotate %108 by %c192_i32 dim 1 : vector<8x256xf32>, i32 -> vector<8x256xf32>
    %217 = vector.extract_strided_slice %109 {offsets = [22, 0], sizes = [1, 256], strides = [1, 1]} : vector<25x256xf32> to vector<1x256xf32>
    %218 = vector.broadcast %217 : vector<1x256xf32> to vector<8x256xf32>
    %219 = arith.mulf %216, %218 : vector<8x256xf32>
    %c176 = arith.constant 176 : index
    %c0_73 = arith.constant 0 : index
    %220 = vector.load %arg9[%c176, %c0_73] : memref<200x256xf32, #tpu.memory_space<vmem>>, vector<8x256xf32>
    tpu.vector_store %arg9[%c176, %c0_73], %219 {strides = array<i32>} : memref<200x256xf32, #tpu.memory_space<vmem>>, vector<8x256xf32>,
    %c190_i32 = arith.constant 190 : i32
    %221 = tpu.dynamic_rotate %108 by %c190_i32 dim 1 : vector<8x256xf32>, i32 -> vector<8x256xf32>
    %222 = vector.extract_strided_slice %109 {offsets = [23, 0], sizes = [1, 256], strides = [1, 1]} : vector<25x256xf32> to vector<1x256xf32>
    %223 = vector.broadcast %222 : vector<1x256xf32> to vector<8x256xf32>
    %224 = arith.mulf %221, %223 : vector<8x256xf32>
    %c184 = arith.constant 184 : index
    %c0_74 = arith.constant 0 : index
    %225 = vector.load %arg9[%c184, %c0_74] : memref<200x256xf32, #tpu.memory_space<vmem>>, vector<8x256xf32>
    tpu.vector_store %arg9[%c184, %c0_74], %224 {strides = array<i32>} : memref<200x256xf32, #tpu.memory_space<vmem>>, vector<8x256xf32>,
    %c188_i32 = arith.constant 188 : i32
    %226 = tpu.dynamic_rotate %108 by %c188_i32 dim 1 : vector<8x256xf32>, i32 -> vector<8x256xf32>
    %227 = vector.extract_strided_slice %109 {offsets = [24, 0], sizes = [1, 256], strides = [1, 1]} : vector<25x256xf32> to vector<1x256xf32>
    %228 = vector.broadcast %227 : vector<1x256xf32> to vector<8x256xf32>
    %229 = arith.mulf %226, %228 : vector<8x256xf32>
    %c192 = arith.constant 192 : index
    %c0_75 = arith.constant 0 : index
    %230 = vector.load %arg9[%c192, %c0_75] : memref<200x256xf32, #tpu.memory_space<vmem>>, vector<8x256xf32>
    tpu.vector_store %arg9[%c192, %c0_75], %229 {strides = array<i32>} : memref<200x256xf32, #tpu.memory_space<vmem>>, vector<8x256xf32>,
    %c0_76 = arith.constant 0 : index
    %c0_77 = arith.constant 0 : index
    %231 = vector.load %arg5[%c0_76, %c0_77] : memref<8x200xf32, #tpu.memory_space<vmem>>, vector<8x200xf32>
    %c0_78 = arith.constant 0 : index
    %c0_79 = arith.constant 0 : index
    %232 = vector.load %arg9[%c0_78, %c0_79] : memref<200x256xf32, #tpu.memory_space<vmem>>, vector<200x256xf32>
    %cst_80 = arith.constant dense<0.000000e+00> : vector<8x256xf32>
    %233 = tpu.matmul %231, %232, %cst_80 {dimension_numbers = #tpu.dot_dimension_numbers<[1], [0], [0], [1], [0, 0, 1, 1], [], []>} : vector<8x200xf32>, vector<200x256xf32>, vector<8x256xf32> -> vector<8x256xf32>
    %c0_81 = arith.constant 0 : index
    %c0_82 = arith.constant 0 : index
    %234 = vector.load %arg6[%c0_81, %c0_82] : memref<8x1xf32, #tpu.memory_space<vmem>>, vector<8x1xf32>
    %235 = vector.broadcast %234 : vector<8x1xf32> to vector<8x256xf32>
    %236 = arith.addf %233, %235 : vector<8x256xf32>
    %cst_83 = arith.constant dense<0.000000e+00> : vector<8xf32>
    %237 = vector.multi_reduction <add>, %236, %cst_83 [1] : vector<8x256xf32> to vector<8xf32>
    %238 = vector.shape_cast %237 : vector<8xf32> to vector<8x1xf32>
    %cst_84 = arith.constant 2.560000e+02 : f32
    %239 = vector.broadcast %cst_84 : f32 to vector<8x1xf32>
    %240 = arith.divf %238, %239 : vector<8x1xf32>
    %241 = vector.broadcast %240 : vector<8x1xf32> to vector<8x256xf32>
    %242 = arith.subf %236, %241 : vector<8x256xf32>
    %243 = arith.mulf %242, %242 : vector<8x256xf32>
    %cst_85 = arith.constant dense<0.000000e+00> : vector<8xf32>
    %244 = vector.multi_reduction <add>, %243, %cst_85 [1] : vector<8x256xf32> to vector<8xf32>
    %245 = vector.shape_cast %244 : vector<8xf32> to vector<8x1xf32>
    %cst_86 = arith.constant 2.560000e+02 : f32
    %246 = vector.broadcast %cst_86 : f32 to vector<8x1xf32>
    %247 = arith.divf %245, %246 : vector<8x1xf32>
    %cst_87 = arith.constant 9.99999974E-6 : f32
    %248 = vector.broadcast %cst_87 : f32 to vector<8x1xf32>
    %249 = arith.addf %247, %248 : vector<8x1xf32>
    %250 = math.rsqrt %249 : vector<8x1xf32>
    %251 = vector.broadcast %250 : vector<8x1xf32> to vector<8x256xf32>
    %252 = arith.mulf %242, %251 : vector<8x256xf32>
    %253 = arith.addf %252, %1 : vector<8x256xf32>
    %cst_88 = arith.constant 0.707106769 : f32
    %254 = vector.broadcast %cst_88 : f32 to vector<8x256xf32>
    %255 = arith.mulf %253, %254 : vector<8x256xf32>
    %256 = math.absf %255 : vector<8x256xf32>
    %cst_89 = arith.constant 0.327591091 : f32
    %257 = vector.broadcast %cst_89 : f32 to vector<8x256xf32>
    %258 = arith.mulf %257, %256 : vector<8x256xf32>
    %cst_90 = arith.constant 1.000000e+00 : f32
    %259 = vector.broadcast %cst_90 : f32 to vector<8x256xf32>
    %260 = arith.addf %259, %258 : vector<8x256xf32>
    %261 = tpu.reciprocal %260 {approx = true} : vector<8x256xf32> -> vector<8x256xf32>
    %262 = arith.mulf %260, %261 : vector<8x256xf32>
    %cst_91 = arith.constant 2.000000e+00 : f32
    %263 = vector.broadcast %cst_91 : f32 to vector<8x256xf32>
    %264 = arith.subf %263, %262 : vector<8x256xf32>
    %265 = arith.mulf %261, %264 : vector<8x256xf32>
    %cst_92 = arith.constant 1.06140542 : f32
    %266 = vector.broadcast %cst_92 : f32 to vector<8x256xf32>
    %267 = arith.mulf %265, %266 : vector<8x256xf32>
    %cst_93 = arith.constant -1.45315206 : f32
    %268 = vector.broadcast %cst_93 : f32 to vector<8x256xf32>
    %269 = arith.addf %268, %267 : vector<8x256xf32>
    %270 = arith.mulf %265, %269 : vector<8x256xf32>
    %cst_94 = arith.constant 1.42141378 : f32
    %271 = vector.broadcast %cst_94 : f32 to vector<8x256xf32>
    %272 = arith.addf %271, %270 : vector<8x256xf32>
    %273 = arith.mulf %265, %272 : vector<8x256xf32>
    %cst_95 = arith.constant -0.284496725 : f32
    %274 = vector.broadcast %cst_95 : f32 to vector<8x256xf32>
    %275 = arith.addf %274, %273 : vector<8x256xf32>
    %276 = arith.mulf %265, %275 : vector<8x256xf32>
    %cst_96 = arith.constant 0.254829586 : f32
    %277 = vector.broadcast %cst_96 : f32 to vector<8x256xf32>
    %278 = arith.addf %277, %276 : vector<8x256xf32>
    %279 = arith.mulf %265, %278 : vector<8x256xf32>
    %cst_97 = arith.constant 0.000000e+00 : f32
    %280 = vector.broadcast %cst_97 : f32 to vector<8x256xf32>
    %281 = arith.subf %280, %256 : vector<8x256xf32>
    %282 = arith.mulf %281, %256 : vector<8x256xf32>
    %283 = math.exp %282 : vector<8x256xf32>
    %284 = arith.mulf %279, %283 : vector<8x256xf32>
    %cst_98 = arith.constant 1.000000e+00 : f32
    %285 = vector.broadcast %cst_98 : f32 to vector<8x256xf32>
    %286 = arith.subf %285, %284 : vector<8x256xf32>
    %cst_99 = arith.constant 0.000000e+00 : f32
    %287 = vector.broadcast %cst_99 : f32 to vector<8x256xf32>
    %288 = arith.cmpf oge, %255, %287 : vector<8x256xf32>
    %cst_100 = arith.constant 0.000000e+00 : f32
    %289 = vector.broadcast %cst_100 : f32 to vector<8x256xf32>
    %290 = arith.subf %289, %286 : vector<8x256xf32>
    %291 = arith.select %288, %286, %290 : vector<8x256xi1>, vector<8x256xf32>
    %cst_101 = arith.constant 5.000000e-01 : f32
    %292 = vector.broadcast %cst_101 : f32 to vector<8x256xf32>
    %293 = arith.mulf %292, %253 : vector<8x256xf32>
    %cst_102 = arith.constant 1.000000e+00 : f32
    %294 = vector.broadcast %cst_102 : f32 to vector<8x256xf32>
    %295 = arith.addf %294, %291 : vector<8x256xf32>
    %296 = arith.mulf %293, %295 : vector<8x256xf32>
    %c0_103 = arith.constant 0 : index
    %c0_104 = arith.constant 0 : index
    %c0_105 = arith.constant 0 : index
    %297 = vector.load %arg8[%c0_103, %c0_104, %c0_105] : memref<1x8x256xf32, #tpu.memory_space<vmem>>, vector<1x8x256xf32>
    %298 = vector.shape_cast %297 : vector<1x8x256xf32> to vector<8x256xf32>
    %299 = vector.shape_cast %296 : vector<8x256xf32> to vector<1x8x256xf32>
    tpu.vector_store %arg8[%c0_103, %c0_104, %c0_105], %299 {strides = array<i32>} : memref<1x8x256xf32, #tpu.memory_space<vmem>>, vector<1x8x256xf32>,
    return
  }
  func.func @transform_0(%arg0: i32) -> (i32, i32, i32) {
    %c0_i32 = arith.constant 0 : i32
    %c0_i32_0 = arith.constant 0 : i32
    %c0_i32_1 = arith.constant 0 : i32
    return %arg0, %c0_i32, %c0_i32_0 : i32, i32, i32
  }
  func.func @transform_1(%arg0: i32) -> (i32, i32) {
    %c0_i32 = arith.constant 0 : i32
    %c0_i32_0 = arith.constant 0 : i32
    %c0_i32_1 = arith.constant 0 : i32
    return %c0_i32, %c0_i32_0 : i32, i32
  }
  func.func @transform_2(%arg0: i32) -> (i32, i32) {
    %c0_i32 = arith.constant 0 : i32
    %c0_i32_0 = arith.constant 0 : i32
    %c0_i32_1 = arith.constant 0 : i32
    return %c0_i32, %c0_i32_0 : i32, i32
  }
  func.func @transform_3(%arg0: i32) -> (i32, i32) {
    %c0_i32 = arith.constant 0 : i32
    %c0_i32_0 = arith.constant 0 : i32
    %c0_i32_1 = arith.constant 0 : i32
    return %c0_i32, %c0_i32_0 : i32, i32
  }
  func.func @transform_4(%arg0: i32) -> (i32, i32) {
    %c0_i32 = arith.constant 0 : i32
    %c0_i32_0 = arith.constant 0 : i32
    %c0_i32_1 = arith.constant 0 : i32
    return %c0_i32, %c0_i32_0 : i32, i32
  }
  func.func @transform_5(%arg0: i32) -> (i32, i32) {
    %c0_i32 = arith.constant 0 : i32
    %c0_i32_0 = arith.constant 0 : i32
    %c0_i32_1 = arith.constant 0 : i32
    return %c0_i32, %c0_i32_0 : i32, i32
  }
  func.func @transform_6(%arg0: i32) -> (i32, i32) {
    %c0_i32 = arith.constant 0 : i32
    %c0_i32_0 = arith.constant 0 : i32
    %c0_i32_1 = arith.constant 0 : i32
    return %c0_i32, %c0_i32_0 : i32, i32
  }
  func.func @transform_7(%arg0: i32) -> (i32, i32, i32) {
    %c0_i32 = arith.constant 0 : i32
    %c0_i32_0 = arith.constant 0 : i32
    %c0_i32_1 = arith.constant 0 : i32
    return %arg0, %c0_i32, %c0_i32_0 : i32, i32, i32
  }
}

</mosaic_0001>

<llo_original>
// kernel: tpu_custom_call.1
$region0: #{tpu_custom_call.1}
  #allocation0 [shape = 'u32[]', space=smem, size = 0x4, offset = 0x4, fixed_abs, tag = 'smem constant byte address 0x4 - core index']
  #allocation1 [shape = 'u32[144,128]{1,0:T(1,128)}', space=vmem, size = 0x12000, scoped, tag = 'internal scratch']
  #allocation2 [shape = 'f32[200,256]{1,0:T(8,128)}', space=vmem, size = 0x32000, scoped, tag = 'scratch operand']
  %s0 = inlined_call_operand.hbm [shape: f32[2,8,256], index: 0, kind: input, shape index: {}]
  %s1 = inlined_call_operand.vmem [shape: f32[8,72], index: 1, kind: input, shape index: {}]
  %s2 = inlined_call_operand.vmem [shape: f32[8,1], index: 2, kind: input, shape index: {}]
  %s3 = inlined_call_operand.hbm [shape: f32[9,256], index: 3, kind: input, shape index: {}]
  %s4 = inlined_call_operand.vmem [shape: f32[8,200], index: 4, kind: input, shape index: {}]
  %s5 = inlined_call_operand.vmem [shape: f32[8,1], index: 5, kind: input, shape index: {}]
  %s6 = inlined_call_operand.hbm [shape: f32[25,256], index: 6, kind: input, shape index: {}]
  %s7 = inlined_call_operand.hbm [shape: f32[2,8,256], index: 7, kind: output, shape index: {}]
  %s8 = sld [smem:[#allocation0]]
  $region73: #{tpu_custom_call.1} parent=0
    _
  %s10 = ssub.s32 1, %s8
  %s11 = scalar_select 0, %s10, %s8
  $region1: #{tpu_custom_call.1} parent=0
    #allocation3 [shape = 'u8[16384]{0}', space=vmem, size = 0x4000, scoped, tag = 'input window, operand 0']
    #allocation4 [shape = 's32[2]{0}', space=sflag, size = 0x8, scoped, tag = 'scoped memory for tpu_custom_call.1']
    #allocation5 [shape = 's32[2]{0}', space=sflag, size = 0x8, scoped, tag = 'scoped memory for tpu_custom_call.1']
    #allocation6 [shape = 'u8[16384]{0}', space=vmem, size = 0x4000, scoped, tag = 'input window, operand 3, single buffered']
    #allocation7 [shape = 's32[1]{0}', space=sflag, size = 0x4, scoped, tag = 'scoped memory for tpu_custom_call.1']
    #allocation8 [shape = 'u8[32768]{0}', space=vmem, size = 0x8000, scoped, tag = 'input window, operand 6, single buffered']
    #allocation9 [shape = 'u8[16384]{0}', space=vmem, size = 0x4000, scoped, tag = 'output window, operand 0']
    %12 = vsyncpa [#allocation4], 0
    %s13 = scalar_lea.sflag [#allocation4], 1
    %14 = vsyncpa %s13, 0
    %15 = vsyncpa [#allocation7], 0
    %16 = vsyncpa [#allocation5], 0
    %s17 = scalar_lea.sflag [#allocation5], 1
    %18 = vsyncpa %s17, 0
    loop: start=0, step=1, limit=4
    $region2: #{tpu_custom_call.1} parent=1 // loop_pre_header
      _
    $region3: #{tpu_custom_call.1} parent=1 // loop_header
      %s20 = sphi 0, %s24
      %p21 = scmp.ge.s32.totalorder %s20, 4
      %s30 = sphi 0, %s32
      %s33 = sphi 0, %s30
      %s34 = sphi 0, %s33
      %s50 = sphi 0, %s34
      %s54 = sphi 0, %s54
      %s56 = sphi 0, %s54
      %s57 = sphi 0, %s56
      %s71 = sphi 0, %s57
      %s75 = sphi 0, %s75
      %s77 = sphi 0, %s75
      %s78 = sphi 0, %s77
      %s92 = sphi 0, %s78
      %s96 = sphi 0, %s96
      %s98 = sphi 0, %s96
      %s99 = sphi 0, %s98
      %s113 = sphi 0, %s99
      %s117 = sphi 0, %s117
      %s119 = sphi 0, %s117
      %s120 = sphi 0, %s119
      %s134 = sphi 0, %s120
      %s138 = sphi 0, %s138
      %s140 = sphi 0, %s138
      %s141 = sphi 0, %s140
      %s155 = sphi 0, %s141
      %s159 = sphi 0, %s159
      %s161 = sphi 0, %s159
      %s162 = sphi 0, %s161
      %s176 = sphi 0, %s162
      %s182 = sphi 0, %s184
      %s185 = sphi 0, %s182
      %s186 = sphi 0, %s185
      %s202 = sphi 0, %s186
    $region4: #{tpu_custom_call.1} parent=1 // loop_header_branch
      %23 = sbr.rel (%p21) target = $region8
    $region5: #{tpu_custom_call.1} parent=1 // loop_body
      %s25 = ssub.s32 %s20, 1
      %s26 = ssub.s32 %s20, 2
      %s27 = sadd.s32 %s20, 1
      %s28 = ssub.s32 %s20, %s27
      %p29 = scmp.eq.s32.totalorder %s28, 0
      %s31 = sadd.s32 %s30, 1
      %s32 = scalar_select %p29, %s30, %s31
      %p35 = pneg %p29
      %p36 = scmp.eq.s32.totalorder %s20, 1
      %p37 = por %p35, %p36
      %p38 = scmp.ne.s32.totalorder %s30, %s33
      %p39 = scmp.eq.s32.totalorder %s20, 0
      %p40 = por %p38, %p39
      %p41 = scmp.ne.s32.totalorder %s30, %s33
      %p42 = scmp.eq.s32.totalorder %s25, 1
      %p43 = por %p41, %p42
      %p44 = scmp.ne.s32.totalorder %s33, %s34
      %p45 = scmp.eq.s32.totalorder %s25, 0
      %p46 = por %p44, %p45
      %p47 = scmp.ne.s32.totalorder %s33, %s34
      %p48 = scmp.eq.s32.totalorder %s26, 1
      %p49 = por %p47, %p48
      %p51 = scmp.ne.s32.totalorder %s34, %s50
      %p52 = scmp.eq.s32.totalorder %s26, 0
      %p53 = por %p51, %p52
      %s55 = sadd.s32 %s54, 1
      %p58 = scmp.eq.s32.totalorder %s20, 1
      %p59 = scmp.ne.s32.totalorder %s54, %s56
      %p60 = scmp.eq.s32.totalorder %s20, 0
      %p61 = por %p59, %p60
      %p62 = scmp.ne.s32.totalorder %s54, %s56
      %p63 = scmp.eq.s32.totalorder %s25, 1
      %p64 = por %p62, %p63
      %p65 = scmp.ne.s32.totalorder %s56, %s57
      %p66 = scmp.eq.s32.totalorder %s25, 0
      %p67 = por %p65, %p66
      %p68 = scmp.ne.s32.totalorder %s56, %s57
      %p69 = scmp.eq.s32.totalorder %s26, 1
      %p70 = por %p68, %p69
      %p72 = scmp.ne.s32.totalorder %s57, %s71
      %p73 = scmp.eq.s32.totalorder %s26, 0
      %p74 = por %p72, %p73
      %s76 = sadd.s32 %s75, 1
      %p79 = scmp.eq.s32.totalorder %s20, 1
      %p80 = scmp.ne.s32.totalorder %s75, %s77
      %p81 = scmp.eq.s32.totalorder %s20, 0
      %p82 = por %p80, %p81
      %p83 = scmp.ne.s32.totalorder %s75, %s77
      %p84 = scmp.eq.s32.totalorder %s25, 1
      %p85 = por %p83, %p84
      %p86 = scmp.ne.s32.totalorder %s77, %s78
      %p87 = scmp.eq.s32.totalorder %s25, 0
      %p88 = por %p86, %p87
      %p89 = scmp.ne.s32.totalorder %s77, %s78
      %p90 = scmp.eq.s32.totalorder %s26, 1
      %p91 = por %p89, %p90
      %p93 = scmp.ne.s32.totalorder %s78, %s92
      %p94 = scmp.eq.s32.totalorder %s26, 0
      %p95 = por %p93, %p94
      %s97 = sadd.s32 %s96, 1
      %p100 = scmp.eq.s32.totalorder %s20, 1
      %p101 = scmp.ne.s32.totalorder %s96, %s98
      %p102 = scmp.eq.s32.totalorder %s20, 0
      %p103 = por %p101, %p102
      %p104 = scmp.ne.s32.totalorder %s96, %s98
      %p105 = scmp.eq.s32.totalorder %s25, 1
      %p106 = por %p104, %p105
      %p107 = scmp.ne.s32.totalorder %s98, %s99
      %p108 = scmp.eq.s32.totalorder %s25, 0
      %p109 = por %p107, %p108
      %p110 = scmp.ne.s32.totalorder %s98, %s99
      %p111 = scmp.eq.s32.totalorder %s26, 1
      %p112 = por %p110, %p111
      %p114 = scmp.ne.s32.totalorder %s99, %s113
      %p115 = scmp.eq.s32.totalorder %s26, 0
      %p116 = por %p114, %p115
      %s118 = sadd.s32 %s117, 1
      %p121 = scmp.eq.s32.totalorder %s20, 1
      %p122 = scmp.ne.s32.totalorder %s117, %s119
      %p123 = scmp.eq.s32.totalorder %s20, 0
      %p124 = por %p122, %p123
      %p125 = scmp.ne.s32.totalorder %s117, %s119
      %p126 = scmp.eq.s32.totalorder %s25, 1
      %p127 = por %p125, %p126
      %p128 = scmp.ne.s32.totalorder %s119, %s120
      %p129 = scmp.eq.s32.totalorder %s25, 0
      %p130 = por %p128, %p129
      %p131 = scmp.ne.s32.totalorder %s119, %s120
      %p132 = scmp.eq.s32.totalorder %s26, 1
      %p133 = por %p131, %p132
      %p135 = scmp.ne.s32.totalorder %s120, %s134
      %p136 = scmp.eq.s32.totalorder %s26, 0
      %p137 = por %p135, %p136
      %s139 = sadd.s32 %s138, 1
      %p142 = scmp.eq.s32.totalorder %s20, 1
      %p143 = scmp.ne.s32.totalorder %s138, %s140
      %p144 = scmp.eq.s32.totalorder %s20, 0
      %p145 = por %p143, %p144
      %p146 = scmp.ne.s32.totalorder %s138, %s140
      %p147 = scmp.eq.s32.totalorder %s25, 1
      %p148 = por %p146, %p147
      %p149 = scmp.ne.s32.totalorder %s140, %s141
      %p150 = scmp.eq.s32.totalorder %s25, 0
      %p151 = por %p149, %p150
      %p152 = scmp.ne.s32.totalorder %s140, %s141
      %p153 = scmp.eq.s32.totalorder %s26, 1
      %p154 = por %p152, %p153
      %p156 = scmp.ne.s32.totalorder %s141, %s155
      %p157 = scmp.eq.s32.totalorder %s26, 0
      %p158 = por %p156, %p157
      %s160 = sadd.s32 %s159, 1
      %p163 = scmp.eq.s32.totalorder %s20, 1
      %p164 = scmp.ne.s32.totalorder %s159, %s161
      %p165 = scmp.eq.s32.totalorder %s20, 0
      %p166 = por %p164, %p165
      %p167 = scmp.ne.s32.totalorder %s159, %s161
      %p168 = scmp.eq.s32.totalorder %s25, 1
      %p169 = por %p167, %p168
      %p170 = scmp.ne.s32.totalorder %s161, %s162
      %p171 = scmp.eq.s32.totalorder %s25, 0
      %p172 = por %p170, %p171
      %p173 = scmp.ne.s32.totalorder %s161, %s162
      %p174 = scmp.eq.s32.totalorder %s26, 1
      %p175 = por %p173, %p174
      %p177 = scmp.ne.s32.totalorder %s162, %s176
      %p178 = scmp.eq.s32.totalorder %s26, 0
      %p179 = por %p177, %p178
      %s180 = ssub.s32 %s20, %s27
      %p181 = scmp.eq.s32.totalorder %s180, 0
      %s183 = sadd.s32 %s182, 1
      %s184 = scalar_select %p181, %s182, %s183
      %p187 = pneg %p181
      %p188 = scmp.eq.s32.totalorder %s20, 1
      %p189 = por %p187, %p188
      %p190 = scmp.ne.s32.totalorder %s182, %s185
      %p191 = scmp.eq.s32.totalorder %s20, 0
      %p192 = por %p190, %p191
      %p193 = scmp.ne.s32.totalorder %s182, %s185
      %p194 = scmp.eq.s32.totalorder %s25, 1
      %p195 = por %p193, %p194
      %p196 = scmp.ne.s32.totalorder %s185, %s186
      %p197 = scmp.eq.s32.totalorder %s25, 0
      %p198 = por %p196, %p197
      %p199 = scmp.ne.s32.totalorder %s185, %s186
      %p200 = scmp.eq.s32.totalorder %s26, 1
      %p201 = por %p199, %p200
      %p203 = scmp.ne.s32.totalorder %s186, %s202
      %p204 = scmp.eq.s32.totalorder %s26, 0
      %p205 = por %p203, %p204
      %p206 = scmp.le.s32.totalorder 1, %s20
      %p207 = scmp.lt.s32.totalorder %s20, 3
      %p208 = pnand %p206, %p207
      %p209 = pneg %p208
      // Predicated region
      $region9: #{tpu_custom_call.1} parent=5 // pred_check
        _
      $region10: #{tpu_custom_call.1} parent=5 // pred_check_branch
        %211 = sbr.rel (%p208) target = $region12
      $region11: #{tpu_custom_call.1} parent=5 // pred_region
        %s212 = ssub.s32 %s20, 1
        // Predicated region
        $region13: #{tpu_custom_call.1} parent=11 // pred_check
          %p213 = pneg %p67
        $region14: #{tpu_custom_call.1} parent=11 // pred_check_branch
          %215 = sbr.rel (%p213) target = $region16
        $region15: #{tpu_custom_call.1} parent=11 // pred_region
          _
        $region16: #{tpu_custom_call.1} parent=11 // pred_fallthru
          _
        // Predicated region
        $region17: #{tpu_custom_call.1} parent=11 // pred_check
          %p216 = pneg %p88
        $region18: #{tpu_custom_call.1} parent=11 // pred_check_branch
          %218 = sbr.rel (%p216) target = $region20
        $region19: #{tpu_custom_call.1} parent=11 // pred_region
          _
        $region20: #{tpu_custom_call.1} parent=11 // pred_fallthru
          _
        // Predicated region
        $region21: #{tpu_custom_call.1} parent=11 // pred_check
          %p219 = pneg %p109
        $region22: #{tpu_custom_call.1} parent=11 // pred_check_branch
          %221 = sbr.rel (%p219) target = $region24
        $region23: #{tpu_custom_call.1} parent=11 // pred_region
          %s223 = ssub.s32 512, 512
          %224 = vsyncadd [#allocation7], %s223
          %s225 = sshll.u32 [#allocation6], 4
          %s226 = int_to_ptr.vmem [resolvable:$true] %s225
          %231 = dma.hbm_to_vmem [thread:$0]  %s3, 512, %s226, [#allocation7], 256, 256, 16
        $region24: #{tpu_custom_call.1} parent=11 // pred_fallthru
          _
        // Predicated region
        $region25: #{tpu_custom_call.1} parent=11 // pred_check
          %p232 = pneg %p130
        $region26: #{tpu_custom_call.1} parent=11 // pred_check_branch
          %234 = sbr.rel (%p232) target = $region28
        $region27: #{tpu_custom_call.1} parent=11 // pred_region
          _
        $region28: #{tpu_custom_call.1} parent=11 // pred_fallthru
          _
        // Predicated region
        $region29: #{tpu_custom_call.1} parent=11 // pred_check
          %p235 = pneg %p151
        $region30: #{tpu_custom_call.1} parent=11 // pred_check_branch
          %237 = sbr.rel (%p235) target = $region32
        $region31: #{tpu_custom_call.1} parent=11 // pred_region
          _
        $region32: #{tpu_custom_call.1} parent=11 // pred_fallthru
          _
        // Predicated region
        $region33: #{tpu_custom_call.1} parent=11 // pred_check
          %p238 = pneg %p172
        $region34: #{tpu_custom_call.1} parent=11 // pred_check_branch
          %240 = sbr.rel (%p238) target = $region36
        $region35: #{tpu_custom_call.1} parent=11 // pred_region
          %s242 = ssub.s32 1024, 1024
          %243 = vsyncadd [#allocation7], %s242
          %s244 = sshll.u32 [#allocation8], 4
          %s245 = int_to_ptr.vmem [resolvable:$true] %s244
          %250 = dma.hbm_to_vmem [thread:$0]  %s6, 1024, %s245, [#allocation7], 256, 256, 16
        $region36: #{tpu_custom_call.1} parent=11 // pred_fallthru
          _
      $region12: #{tpu_custom_call.1} parent=5 // pred_fallthru
        _
      %p251 = scmp.lt.s32.totalorder %s20, 2
      // Predicated region
      $region37: #{tpu_custom_call.1} parent=5 // pred_check
        %p252 = pneg %p251
      $region38: #{tpu_custom_call.1} parent=5 // pred_check_branch
        %254 = sbr.rel (%p252) target = $region40
      $region39: #{tpu_custom_call.1} parent=5 // pred_region
        // Predicated region
        $region41: #{tpu_custom_call.1} parent=39 // pred_check
          %p255 = pneg %p40
        $region42: #{tpu_custom_call.1} parent=39 // pred_check_branch
          %257 = sbr.rel (%p255) target = $region44
        $region43: #{tpu_custom_call.1} parent=39 // pred_region
          %s258 = sand.u32 %s30, 1
          %s259 = scalar_lea.sflag [#allocation4], %s258
          %s260 = sand.u32 %s30, 1
          %s261 = smul.addr %s260, 16
          %s262 = scalar_lea.vmem [#allocation3], %s261
          %s264 = ssub.s32 256, 256
          %265 = vsyncadd %s259, %s264
          %s266 = smul.addr %s20, 2
          %s267 = smul.addr %s266, 128
          %s268 = scalar_lea.hbm %s0, %s267
          %s270 = sshll.u32 %s262, 4
          %s271 = int_to_ptr.vmem [resolvable:$true] %s270
          %273 = dma.hbm_to_vmem [thread:$0]  %s268, 256, %s271, %s259
        $region44: #{tpu_custom_call.1} parent=39 // pred_fallthru
          _
      $region40: #{tpu_custom_call.1} parent=5 // pred_fallthru
        _
      %p274 = scmp.le.s32.totalorder 1, %s20
      %p275 = scmp.lt.s32.totalorder %s20, 3
      %p276 = pnand %p274, %p275
      %p277 = pneg %p276
      // Predicated region
      $region45: #{tpu_custom_call.1} parent=5 // pred_check
        _
      $region46: #{tpu_custom_call.1} parent=5 // pred_check_branch
        %279 = sbr.rel (%p276) target = $region48
      $region47: #{tpu_custom_call.1} parent=5 // pred_region
        %s280 = ssub.s32 %s20, 1
        %s281 = sand.u32 %s33, 1
        %s282 = scalar_lea.sflag [#allocation4], %s281
        %s283 = sand.u32 %s33, 1
        %s284 = smul.addr %s283, 16
        %s285 = scalar_lea.vmem [#allocation3], %s284
        // Predicated region
        $region49: #{tpu_custom_call.1} parent=47 // pred_check
          %p286 = pneg %p46
        $region50: #{tpu_custom_call.1} parent=47 // pred_check_branch
          %288 = sbr.rel (%p286) target = $region52
        $region51: #{tpu_custom_call.1} parent=47 // pred_region
          %289 = dma.done %s282, 256
        $region52: #{tpu_custom_call.1} parent=47 // pred_fallthru
          _
        // Predicated region
        $region53: #{tpu_custom_call.1} parent=47 // pred_check
          %p290 = pneg %p109
        $region54: #{tpu_custom_call.1} parent=47 // pred_check_branch
          %292 = sbr.rel (%p290) target = $region56
        $region55: #{tpu_custom_call.1} parent=47 // pred_region
          %293 = dma.done [#allocation7], 512
        $region56: #{tpu_custom_call.1} parent=47 // pred_fallthru
          _
        // Predicated region
        $region57: #{tpu_custom_call.1} parent=47 // pred_check
          %p294 = pneg %p172
        $region58: #{tpu_custom_call.1} parent=47 // pred_check_branch
          %296 = sbr.rel (%p294) target = $region60
        $region59: #{tpu_custom_call.1} parent=47 // pred_region
          %297 = dma.done [#allocation7], 1024
        $region60: #{tpu_custom_call.1} parent=47 // pred_fallthru
          _
        %s298 = sand.u32 %s33, 1
        %s299 = scalar_lea.sflag [#allocation4], %s298
        %s300 = sand.u32 %s33, 1
        %s301 = smul.addr %s300, 16
        %s302 = scalar_lea.vmem [#allocation3], %s301
        %p303 = pneg %p46
        %p304 = pneg %p43
        %p305 = pneg %p67
        %p306 = pneg %p64
        %p307 = pneg %p88
        %p308 = pneg %p85
        %p309 = pneg %p109
        %p310 = pneg %p106
        %p311 = pneg %p130
        %p312 = pneg %p127
        %p313 = pneg %p151
        %p314 = pneg %p148
        %p315 = pneg %p172
        %p316 = pneg %p169
        %p317 = pneg %p198
        %p318 = pneg %p195
        %s319 = sand.u32 %s185, 1
        %s320 = scalar_lea.sflag [#allocation5], %s319
        %s321 = sand.u32 %s185, 1
        %s322 = smul.addr %s321, 16
        %s323 = scalar_lea.vmem [#allocation9], %s322
        %v324 = vld [vmem:[%s285] sm:$0xff]
        %v325 = vld [vmem:[%s285 + $0x8] sm:$0xff]
        %v326 = vld [vmem:[#allocation6] sm:$0xff]
        %v327 = vld [vmem:[#allocation6 + $0x8] sm:$0xff]
        %v328 = vld [vmem:[#allocation6 + $0x10] sm:$0x1]
        %v329 = vld [vmem:[#allocation6 + $0x18] sm:$0x1]
        %330 = vrot.lane.b32.xlu0 %v324, 17
        %v331 = vpop.permute.xlu0 %330
        %332 = vrot.lane.b32.xlu0 %v325, 17
        %v333 = vpop.permute.xlu0 %332
        %v334 = vlaneseq
        %v335 = vand.u32 %v334, 127
        %vm336 = vcmp.lt.s32.totalorder %v335, 17
        %v337 = vsel %vm336, %v331, %v333
        %v338 = vsel %vm336, %v333, %v331
        %v339 = vlaneseq
        %v340 = vshrl.u32 %v339, 7
        %v341 = vsub.s32 0, %v340
        %v342 = vrot.slane %v326, %v341
        %v343 = vlaneseq
        %v344 = vshrl.u32 %v343, 7
        %v345 = vsub.s32 0, %v344
        %v346 = vrot.slane %v327, %v345
        %v347 = vmul.f32 %v338, %v342
        %v348 = vmul.f32 %v337, %v346
        %349 = vst [vmem:[#allocation2] sm:$0xff] %v347
        %350 = vst [vmem:[#allocation2 + $0x8] sm:$0xff] %v348
        %351 = vrot.lane.b32.xlu0 %v324, 16
        %v352 = vpop.permute.xlu0 %351
        %353 = vrot.lane.b32.xlu0 %v325, 16
        %v354 = vpop.permute.xlu0 %353
        %vm355 = vcmp.lt.s32.totalorder %v335, 16
        %v356 = vsel %vm355, %v352, %v354
        %v357 = vsel %vm355, %v354, %v352
        %v358 = vlaneseq
        %v359 = vshrl.u32 %v358, 7
        %v360 = vsub.s32 1, %v359
        %v361 = vrot.slane %v326, %v360
        %v362 = vlaneseq
        %v363 = vshrl.u32 %v362, 7
        %v364 = vsub.s32 1, %v363
        %v365 = vrot.slane %v327, %v364
        %v366 = vmul.f32 %v357, %v361
        %v367 = vmul.f32 %v356, %v365
        %368 = vst [vmem:[#allocation2 + $0x10] sm:$0xff] %v366
        %369 = vst [vmem:[#allocation2 + $0x18] sm:$0xff] %v367
        %370 = vrot.lane.b32.xlu0 %v324, 15
        %v371 = vpop.permute.xlu0 %370
        %372 = vrot.lane.b32.xlu0 %v325, 15
        %v373 = vpop.permute.xlu0 %372
        %vm374 = vcmp.lt.s32.totalorder %v335, 15
        %v375 = vsel %vm374, %v371, %v373
        %v376 = vsel %vm374, %v373, %v371
        %v377 = vlaneseq
        %v378 = vshrl.u32 %v377, 7
        %v379 = vsub.s32 2, %v378
        %v380 = vrot.slane %v326, %v379
        %v381 = vlaneseq
        %v382 = vshrl.u32 %v381, 7
        %v383 = vsub.s32 2, %v382
        %v384 = vrot.slane %v327, %v383
        %v385 = vmul.f32 %v376, %v380
        %v386 = vmul.f32 %v375, %v384
        %387 = vst [vmem:[#allocation2 + $0x20] sm:$0xff] %v385
        %388 = vst [vmem:[#allocation2 + $0x28] sm:$0xff] %v386
        %389 = vrot.lane.b32.xlu0 %v324, 1
        %v390 = vpop.permute.xlu0 %389
        %391 = vrot.lane.b32.xlu0 %v325, 1
        %v392 = vpop.permute.xlu0 %391
        %vm393 = vcmp.lt.s32.totalorder %v335, 1
        %v394 = vsel %vm393, %v390, %v392
        %v395 = vsel %vm393, %v392, %v390
        %v396 = vlaneseq
        %v397 = vshrl.u32 %v396, 7
        %v398 = vsub.s32 3, %v397
        %v399 = vrot.slane %v326, %v398
        %v400 = vlaneseq
        %v401 = vshrl.u32 %v400, 7
        %v402 = vsub.s32 3, %v401
        %v403 = vrot.slane %v327, %v402
        %v404 = vmul.f32 %v395, %v399
        %v405 = vmul.f32 %v394, %v403
        %406 = vst [vmem:[#allocation2 + $0x30] sm:$0xff] %v404
        %407 = vst [vmem:[#allocation2 + $0x38] sm:$0xff] %v405
        %408 = vst [vmem:[#allocation2 + $0x40] sm:$0xff] %v324
        %409 = vst [vmem:[#allocation2 + $0x48] sm:$0xff] %v325
        %410 = vrot.lane.b32.xlu0 %v324, 127
        %v411 = vpop.permute.xlu0 %410
        %412 = vrot.lane.b32.xlu0 %v325, 127
        %v413 = vpop.permute.xlu0 %412
        %vm414 = vcmp.lt.s32.totalorder %v335, 127
        %v415 = vsel %vm414, %v411, %v413
        %v416 = vsel %vm414, %v413, %v411
        %v417 = vlaneseq
        %v418 = vshrl.u32 %v417, 7
        %v419 = vsub.s32 5, %v418
        %v420 = vrot.slane %v326, %v419
        %v421 = vlaneseq
        %v422 = vshrl.u32 %v421, 7
        %v423 = vsub.s32 5, %v422
        %v424 = vrot.slane %v327, %v423
        %v425 = vmul.f32 %v415, %v420
        %v426 = vmul.f32 %v416, %v424
        %427 = vst [vmem:[#allocation2 + $0x50] sm:$0xff] %v425
        %428 = vst [vmem:[#allocation2 + $0x58] sm:$0xff] %v426
        %429 = vrot.lane.b32.xlu0 %v324, 113
        %v430 = vpop.permute.xlu0 %429
        %431 = vrot.lane.b32.xlu0 %v325, 113
        %v432 = vpop.permute.xlu0 %431
        %vm433 = vcmp.lt.s32.totalorder %v335, 113
        %v434 = vsel %vm433, %v430, %v432
        %v435 = vsel %vm433, %v432, %v430
        %v436 = vlaneseq
        %v437 = vshrl.u32 %v436, 7
        %v438 = vsub.s32 6, %v437
        %v439 = vrot.slane %v326, %v438
        %v440 = vlaneseq
        %v441 = vshrl.u32 %v440, 7
        %v442 = vsub.s32 6, %v441
        %v443 = vrot.slane %v327, %v442
        %v444 = vmul.f32 %v434, %v439
        %v445 = vmul.f32 %v435, %v443
        %446 = vst [vmem:[#allocation2 + $0x60] sm:$0xff] %v444
        %447 = vst [vmem:[#allocation2 + $0x68] sm:$0xff] %v445
        %448 = vrot.lane.b32.xlu0 %v324, 112
        %v449 = vpop.permute.xlu0 %448
        %450 = vrot.lane.b32.xlu0 %v325, 112
        %v451 = vpop.permute.xlu0 %450
        %vm452 = vcmp.lt.s32.totalorder %v335, 112
        %v453 = vsel %vm452, %v449, %v451
        %v454 = vsel %vm452, %v451, %v449
        %v455 = vlaneseq
        %v456 = vshrl.u32 %v455, 7
        %v457 = vsub.s32 7, %v456
        %v458 = vrot.slane %v326, %v457
        %v459 = vlaneseq
        %v460 = vshrl.u32 %v459, 7
        %v461 = vsub.s32 7, %v460
        %v462 = vrot.slane %v327, %v461
        %v463 = vmul.f32 %v453, %v458
        %v464 = vmul.f32 %v454, %v462
        %465 = vst [vmem:[#allocation2 + $0x70] sm:$0xff] %v463
        %466 = vst [vmem:[#allocation2 + $0x78] sm:$0xff] %v464
        %467 = vrot.lane.b32.xlu0 %v324, 111
        %v468 = vpop.permute.xlu0 %467
        %469 = vrot.lane.b32.xlu0 %v325, 111
        %v470 = vpop.permute.xlu0 %469
        %vm471 = vcmp.lt.s32.totalorder %v335, 111
        %v472 = vsel %vm471, %v468, %v470
        %v473 = vsel %vm471, %v470, %v468
        %v474 = vlaneseq
        %v475 = vshrl.u32 %v474, 7
        %v476 = vsub.s32 0, %v475
        %v477 = vrot.slane %v328, %v476
        %v478 = vlaneseq
        %v479 = vshrl.u32 %v478, 7
        %v480 = vsub.s32 0, %v479
        %v481 = vrot.slane %v329, %v480
        %v482 = vmul.f32 %v472, %v477
        %v483 = vmul.f32 %v473, %v481
        %484 = vst [vmem:[#allocation2 + $0x80] sm:$0xff] %v482
        %485 = vst [vmem:[#allocation2 + $0x88] sm:$0xff] %v483
        %v486 = vld [vmem:[%s1] sm:$0xff]
        %v487 = vld [vmem:[#allocation2] sm:$0xff]
        %v488 = vld [vmem:[#allocation2 + $0x8] sm:$0xff]
        %v489 = vld [vmem:[#allocation2 + $0x10] sm:$0xff]
        %v490 = vld [vmem:[#allocation2 + $0x18] sm:$0xff]
        %v491 = vld [vmem:[#allocation2 + $0x20] sm:$0xff]
        %v492 = vld [vmem:[#allocation2 + $0x28] sm:$0xff]
        %v493 = vld [vmem:[#allocation2 + $0x30] sm:$0xff]
        %v494 = vld [vmem:[#allocation2 + $0x38] sm:$0xff]
        %v495 = vld [vmem:[#allocation2 + $0x40] sm:$0xff]
        %v496 = vld [vmem:[#allocation2 + $0x48] sm:$0xff]
        %v497 = vld [vmem:[#allocation2 + $0x50] sm:$0xff]
        %v498 = vld [vmem:[#allocation2 + $0x58] sm:$0xff]
        %v499 = vld [vmem:[#allocation2 + $0x60] sm:$0xff]
        %v500 = vld [vmem:[#allocation2 + $0x68] sm:$0xff]
        %v501 = vld [vmem:[#allocation2 + $0x70] sm:$0xff]
        %v502 = vld [vmem:[#allocation2 + $0x78] sm:$0xff]
        %v503 = vld [vmem:[#allocation2 + $0x80] sm:$0xff]
        %v504 = vld [vmem:[#allocation2 + $0x88] sm:$0xff]
        %v505 = vld [vmem:[%s2] sm:$0xff]
        %507 = vset.pattern.permute.xlu0 0
        %508 = vperm.xlu0 %507, %v505
        %v509 = vpop.permute.xlu0 %508
        %vm511 = vcmask 588800
        %v513 = vsel %vm511, %v486, 0
        %515 = vmatprep.subr.mxu0 %v488
        %516 = vmatpush1.msra.mxu0 %v487
        %517 = vmatprep.subr.mxu0 %v490
        %518 = vmatpush1.msra.mxu0 %v489
        %519 = vmatprep.subr.mxu0 %v492
        %520 = vmatpush1.msra.mxu0 %v491
        %521 = vmatprep.subr.mxu0 %v494
        %522 = vmatpush1.msra.mxu0 %v493
        %523 = vmatprep.subr.mxu0 %v496
        %524 = vmatpush1.msra.mxu0 %v495
        %525 = vmatprep.subr.mxu0 %v498
        %526 = vmatpush1.msra.mxu0 %v497
        %527 = vmatprep.subr.mxu0 %v500
        %528 = vmatpush1.msra.mxu0 %v499
        %529 = vmatprep.subr.mxu0 %v502
        %530 = vmatpush1.msra.mxu0 %v501
        %531 = vmatprep.subr.mxu0 %v504
        %532 = vmatpush1.msra.mxu0 %v503
        %533 = vmatprep.subr.mxu0 0.0
        %534 = vmatpush1.msra.mxu0 0.0
        %535 = vmatprep.subr.mxu0 0.0
        %536 = vmatpush1.msra.mxu0 0.0
        %537 = vmatprep.subr.mxu0 0.0
        %538 = vmatpush1.msra.mxu0 0.0
        %539 = vmatprep.subr.mxu0 0.0
        %540 = vmatpush1.msra.mxu0 0.0
        %541 = vmatprep.subr.mxu0 0.0
        %542 = vmatpush1.msra.mxu0 0.0
        %543 = vmatprep.subr.mxu0 0.0
        %544 = vmatpush1.msra.mxu0 0.0
        %545 = vmatprep.subr.mxu0 0.0
        %546 = vmatpush1.msra.mxu0 0.0
        %547 = vmatprep.subr.mxu0 0.0
        %548 = vmatpush1.msra.mxu0 0.0
        %549 = vmatprep.subr.mxu0 0.0
        %550 = vmatpush1.msra.mxu0 0.0
        %551 = vmatprep.subr.mxu0 0.0
        %552 = vmatpush1.msra.mxu0 0.0
        %553 = vmatprep.subr.mxu0 0.0
        %554 = vmatpush1.msra.mxu0 0.0
        %555 = vmatprep.subr.mxu0 0.0
        %556 = vmatpush1.msra.mxu0 0.0
        %557 = vmatprep.subr.mxu0 0.0
        %558 = vmatpush1.msra.mxu0 0.0
        %559 = vmatprep.subr.mxu0 0.0
        %560 = vmatpush1.msra.mxu0 0.0
        %561 = vmatprep.subr.mxu0 0.0
        %562 = vmatpush1.msra.mxu0 0.0
        %563 = vmatprep.subr.mxu0 0.0
        %564 = vmatpush1.msra.mxu0 0.0
        %565 = vmatprep.subr.mxu0 0.0
        %566 = vmatpush1.msra.mxu0 0.0
        %567 = vmatprep.subr.mxu0 0.0
        %568 = vmatpush1.msra.mxu0 0.0
        %569 = vmatprep.subr.mxu0 0.0
        %570 = vmatpush1.msra.mxu0 0.0
        %571 = vmatprep.subr.mxu0 0.0
        %572 = vmatpush1.msra.mxu0 0.0
        %573 = vmatprep.subr.mxu0 0.0
        %574 = vmatpush1.msra.mxu0 0.0
        %575 = vmatprep.subr.mxu0 0.0
        %576 = vmatpush1.msra.mxu0 0.0
        %577 = vmatprep.subr.mxu0 0.0
        %578 = vmatpush1.msra.mxu0 0.0
        %579 = vmatprep.mubr.f32.mxu0 0.0
        %580 = vmatmul.mubr.f32.gmra.mrb[0].mxu0 %v513
        %v581 = vpop.f32.mrb[0].mxu0
        %v582 = vadd.f32 %v509, %v581
        %v583 = vpop.f32.mrb[0].mxu0
        %v584 = vadd.f32 %v509, %v583
        %585 = vdwg.mxu0
        %v586 = vadd.f32 %v582, %v584
        %587 = vadd.xlane.f32.xlu0 %v586
        %v588 = vpop.xlane.xlu0 %587
        %v589 = vrcp.pop 256.0
        %v590 = vmul.f32 %v588, %v589
        %v591 = vsub.f32 %v582, %v590
        %v592 = vsub.f32 %v584, %v590
        %v593 = vmul.f32 %v591, %v591
        %v594 = vmul.f32 %v592, %v592
        %v595 = vadd.f32 %v593, %v594
        %596 = vadd.xlane.f32.xlu0 %v595
        %v597 = vpop.xlane.xlu0 %596
        %v598 = vmul.f32 %v597, %v589
        %v599 = vadd.f32 %v598, 1e-05
        %v600 = vrsqrt.pop %v599
        %v601 = vmul.f32 %v591, %v600
        %v602 = vmul.f32 %v592, %v600
        %v603 = vmul.f32 %v601, 0.70710677
        %v604 = vmul.f32 %v602, 0.70710677
        %v605 = vand.u32 2147483647, %v603
        %v606 = vand.u32 2147483647, %v604
        %v607 = vmul.f32 %v605, 0.3275911
        %v608 = vmul.f32 %v606, 0.3275911
        %v609 = vadd.f32 %v607, 1.0
        %v610 = vadd.f32 %v608, 1.0
        %v611 = vrcp.pop %v609
        %v612 = vrcp.pop %v610
        %v613 = vmul.f32 %v609, %v611
        %v614 = vmul.f32 %v610, %v612
        %v615 = vsub.f32 2.0, %v613
        %v616 = vsub.f32 2.0, %v614
        %v617 = vmul.f32 %v611, %v615
        %v618 = vmul.f32 %v612, %v616
        %v619 = vmul.f32 %v617, 1.0614054
        %v620 = vmul.f32 %v618, 1.0614054
        %v621 = vadd.f32 %v619, -1.4531521
        %v622 = vadd.f32 %v620, -1.4531521
        %v623 = vmul.f32 %v617, %v621
        %v624 = vmul.f32 %v618, %v622
        %v625 = vadd.f32 %v623, 1.4214138
        %v626 = vadd.f32 %v624, 1.4214138
        %v627 = vmul.f32 %v617, %v625
        %v628 = vmul.f32 %v618, %v626
        %v629 = vadd.f32 %v627, -0.28449672
        %v630 = vadd.f32 %v628, -0.28449672
        %v631 = vmul.f32 %v617, %v629
        %v632 = vmul.f32 %v618, %v630
        %v633 = vadd.f32 %v631, 0.2548296
        %v634 = vadd.f32 %v632, 0.2548296
        %v635 = vmul.f32 %v617, %v633
        %v636 = vmul.f32 %v618, %v634
        %v637 = vsub.f32 0.0, %v605
        %v638 = vsub.f32 0.0, %v606
        %v639 = vmul.f32 %v637, %v605
        %v640 = vmul.f32 %v638, %v606
        %v641 = vmul.f32 %v639, 1.442695
        %v642 = vpow.pop %v641
        %v643 = vmul.f32 %v640, 1.442695
        %v644 = vpow.pop %v643
        %v645 = vmul.f32 %v635, %v642
        %v646 = vmul.f32 %v636, %v644
        %v647 = vsub.f32 1.0, %v645
        %v648 = vsub.f32 1.0, %v646
        %vm649 = vcmp.ge.f32.partialorder %v603, 0.0
        %vm650 = vcmp.ge.f32.partialorder %v604, 0.0
        %v651 = vsub.f32 0.0, %v647
        %v652 = vsub.f32 0.0, %v648
        %v653 = vsel %vm649, %v647, %v651
        %v654 = vsel %vm650, %v648, %v652
        %v655 = vmul.f32 %v601, 0.5
        %v656 = vmul.f32 %v602, 0.5
        %v657 = vadd.f32 %v653, 1.0
        %v658 = vadd.f32 %v654, 1.0
        %v659 = vmul.f32 %v655, %v657
        %v660 = vmul.f32 %v656, %v658
        %v661 = vld [vmem:[#allocation8] sm:$0xff]
        %v662 = vld [vmem:[#allocation8 + $0x8] sm:$0xff]
        %v663 = vld [vmem:[#allocation8 + $0x10] sm:$0xff]
        %v664 = vld [vmem:[#allocation8 + $0x18] sm:$0xff]
        %v665 = vld [vmem:[#allocation8 + $0x20] sm:$0xff]
        %v666 = vld [vmem:[#allocation8 + $0x28] sm:$0xff]
        %v667 = vld [vmem:[#allocation8 + $0x30] sm:$0x1]
        %v668 = vld [vmem:[#allocation8 + $0x38] sm:$0x1]
        %669 = vrot.lane.b32.xlu0 %v659, 68
        %v670 = vpop.permute.xlu0 %669
        %671 = vrot.lane.b32.xlu0 %v660, 68
        %v672 = vpop.permute.xlu0 %671
        %vm673 = vcmp.lt.s32.totalorder %v335, 68
        %v674 = vsel %vm673, %v670, %v672
        %v675 = vsel %vm673, %v672, %v670
        %v676 = vlaneseq
        %v677 = vshrl.u32 %v676, 7
        %v678 = vsub.s32 0, %v677
        %v679 = vrot.slane %v661, %v678
        %v680 = vlaneseq
        %v681 = vshrl.u32 %v680, 7
        %v682 = vsub.s32 0, %v681
        %v683 = vrot.slane %v662, %v682
        %v684 = vmul.f32 %v675, %v679
        %v685 = vmul.f32 %v674, %v683
        %686 = vst [vmem:[#allocation2] sm:$0xff] %v684
        %687 = vst [vmem:[#allocation2 + $0x8] sm:$0xff] %v685
        %688 = vrot.lane.b32.xlu0 %v659, 66
        %v689 = vpop.permute.xlu0 %688
        %690 = vrot.lane.b32.xlu0 %v660, 66
        %v691 = vpop.permute.xlu0 %690
        %vm692 = vcmp.lt.s32.totalorder %v335, 66
        %v693 = vsel %vm692, %v689, %v691
        %v694 = vsel %vm692, %v691, %v689
        %v695 = vlaneseq
        %v696 = vshrl.u32 %v695, 7
        %v697 = vsub.s32 1, %v696
        %v698 = vrot.slane %v661, %v697
        %v699 = vlaneseq
        %v700 = vshrl.u32 %v699, 7
        %v701 = vsub.s32 1, %v700
        %v702 = vrot.slane %v662, %v701
        %v703 = vmul.f32 %v694, %v698
        %v704 = vmul.f32 %v693, %v702
        %705 = vst [vmem:[#allocation2 + $0x10] sm:$0xff] %v703
        %706 = vst [vmem:[#allocation2 + $0x18] sm:$0xff] %v704
        %707 = vrot.lane.b32.xlu0 %v659, 64
        %v708 = vpop.permute.xlu0 %707
        %709 = vrot.lane.b32.xlu0 %v660, 64
        %v710 = vpop.permute.xlu0 %709
        %vm711 = vcmp.lt.s32.totalorder %v335, 64
        %v712 = vsel %vm711, %v708, %v710
        %v713 = vsel %vm711, %v710, %v708
        %v714 = vlaneseq
        %v715 = vshrl.u32 %v714, 7
        %v716 = vsub.s32 2, %v715
        %v717 = vrot.slane %v661, %v716
        %v718 = vlaneseq
        %v719 = vshrl.u32 %v718, 7
        %v720 = vsub.s32 2, %v719
        %v721 = vrot.slane %v662, %v720
        %v722 = vmul.f32 %v713, %v717
        %v723 = vmul.f32 %v712, %v721
        %724 = vst [vmem:[#allocation2 + $0x20] sm:$0xff] %v722
        %725 = vst [vmem:[#allocation2 + $0x28] sm:$0xff] %v723
        %726 = vrot.lane.b32.xlu0 %v659, 62
        %v727 = vpop.permute.xlu0 %726
        %728 = vrot.lane.b32.xlu0 %v660, 62
        %v729 = vpop.permute.xlu0 %728
        %vm730 = vcmp.lt.s32.totalorder %v335, 62
        %v731 = vsel %vm730, %v727, %v729
        %v732 = vsel %vm730, %v729, %v727
        %v733 = vlaneseq
        %v734 = vshrl.u32 %v733, 7
        %v735 = vsub.s32 3, %v734
        %v736 = vrot.slane %v661, %v735
        %v737 = vlaneseq
        %v738 = vshrl.u32 %v737, 7
        %v739 = vsub.s32 3, %v738
        %v740 = vrot.slane %v662, %v739
        %v741 = vmul.f32 %v732, %v736
        %v742 = vmul.f32 %v731, %v740
        %743 = vst [vmem:[#allocation2 + $0x30] sm:$0xff] %v741
        %744 = vst [vmem:[#allocation2 + $0x38] sm:$0xff] %v742
        %745 = vrot.lane.b32.xlu0 %v659, 60
        %v746 = vpop.permute.xlu0 %745
        %747 = vrot.lane.b32.xlu0 %v660, 60
        %v748 = vpop.permute.xlu0 %747
        %vm749 = vcmp.lt.s32.totalorder %v335, 60
        %v750 = vsel %vm749, %v746, %v748
        %v751 = vsel %vm749, %v748, %v746
        %v752 = vlaneseq
        %v753 = vshrl.u32 %v752, 7
        %v754 = vsub.s32 4, %v753
        %v755 = vrot.slane %v661, %v754
        %v756 = vlaneseq
        %v757 = vshrl.u32 %v756, 7
        %v758 = vsub.s32 4, %v757
        %v759 = vrot.slane %v662, %v758
        %v760 = vmul.f32 %v751, %v755
        %v761 = vmul.f32 %v750, %v759
        %762 = vst [vmem:[#allocation2 + $0x40] sm:$0xff] %v760
        %763 = vst [vmem:[#allocation2 + $0x48] sm:$0xff] %v761
        %764 = vrot.lane.b32.xlu0 %v659, 36
        %v765 = vpop.permute.xlu0 %764
        %766 = vrot.lane.b32.xlu0 %v660, 36
        %v767 = vpop.permute.xlu0 %766
        %vm768 = vcmp.lt.s32.totalorder %v335, 36
        %v769 = vsel %vm768, %v765, %v767
        %v770 = vsel %vm768, %v767, %v765
        %v771 = vlaneseq
        %v772 = vshrl.u32 %v771, 7
        %v773 = vsub.s32 5, %v772
        %v774 = vrot.slane %v661, %v773
        %v775 = vlaneseq
        %v776 = vshrl.u32 %v775, 7
        %v777 = vsub.s32 5, %v776
        %v778 = vrot.slane %v662, %v777
        %v779 = vmul.f32 %v770, %v774
        %v780 = vmul.f32 %v769, %v778
        %781 = vst [vmem:[#allocation2 + $0x50] sm:$0xff] %v779
        %782 = vst [vmem:[#allocation2 + $0x58] sm:$0xff] %v780
        %783 = vrot.lane.b32.xlu0 %v659, 34
        %v784 = vpop.permute.xlu0 %783
        %785 = vrot.lane.b32.xlu0 %v660, 34
        %v786 = vpop.permute.xlu0 %785
        %vm787 = vcmp.lt.s32.totalorder %v335, 34
        %v788 = vsel %vm787, %v784, %v786
        %v789 = vsel %vm787, %v786, %v784
        %v790 = vlaneseq
        %v791 = vshrl.u32 %v790, 7
        %v792 = vsub.s32 6, %v791
        %v793 = vrot.slane %v661, %v792
        %v794 = vlaneseq
        %v795 = vshrl.u32 %v794, 7
        %v796 = vsub.s32 6, %v795
        %v797 = vrot.slane %v662, %v796
        %v798 = vmul.f32 %v789, %v793
        %v799 = vmul.f32 %v788, %v797
        %800 = vst [vmem:[#allocation2 + $0x60] sm:$0xff] %v798
        %801 = vst [vmem:[#allocation2 + $0x68] sm:$0xff] %v799
        %802 = vrot.lane.b32.xlu0 %v659, 32
        %v803 = vpop.permute.xlu0 %802
        %804 = vrot.lane.b32.xlu0 %v660, 32
        %v805 = vpop.permute.xlu0 %804
        %vm806 = vcmp.lt.s32.totalorder %v335, 32
        %v807 = vsel %vm806, %v803, %v805
        %v808 = vsel %vm806, %v805, %v803
        %v809 = vlaneseq
        %v810 = vshrl.u32 %v809, 7
        %v811 = vsub.s32 7, %v810
        %v812 = vrot.slane %v661, %v811
        %v813 = vlaneseq
        %v814 = vshrl.u32 %v813, 7
        %v815 = vsub.s32 7, %v814
        %v816 = vrot.slane %v662, %v815
        %v817 = vmul.f32 %v808, %v812
        %v818 = vmul.f32 %v807, %v816
        %819 = vst [vmem:[#allocation2 + $0x70] sm:$0xff] %v817
        %820 = vst [vmem:[#allocation2 + $0x78] sm:$0xff] %v818
        %821 = vrot.lane.b32.xlu0 %v659, 30
        %v822 = vpop.permute.xlu0 %821
        %823 = vrot.lane.b32.xlu0 %v660, 30
        %v824 = vpop.permute.xlu0 %823
        %vm825 = vcmp.lt.s32.totalorder %v335, 30
        %v826 = vsel %vm825, %v822, %v824
        %v827 = vsel %vm825, %v824, %v822
        %v828 = vlaneseq
        %v829 = vshrl.u32 %v828, 7
        %v830 = vsub.s32 0, %v829
        %v831 = vrot.slane %v663, %v830
        %v832 = vlaneseq
        %v833 = vshrl.u32 %v832, 7
        %v834 = vsub.s32 0, %v833
        %v835 = vrot.slane %v664, %v834
        %v836 = vmul.f32 %v827, %v831
        %v837 = vmul.f32 %v826, %v835
        %838 = vst [vmem:[#allocation2 + $0x80] sm:$0xff] %v836
        %839 = vst [vmem:[#allocation2 + $0x88] sm:$0xff] %v837
        %840 = vrot.lane.b32.xlu0 %v659, 28
        %v841 = vpop.permute.xlu0 %840
        %842 = vrot.lane.b32.xlu0 %v660, 28
        %v843 = vpop.permute.xlu0 %842
        %vm844 = vcmp.lt.s32.totalorder %v335, 28
        %v845 = vsel %vm844, %v841, %v843
        %v846 = vsel %vm844, %v843, %v841
        %v847 = vlaneseq
        %v848 = vshrl.u32 %v847, 7
        %v849 = vsub.s32 1, %v848
        %v850 = vrot.slane %v663, %v849
        %v851 = vlaneseq
        %v852 = vshrl.u32 %v851, 7
        %v853 = vsub.s32 1, %v852
        %v854 = vrot.slane %v664, %v853
        %v855 = vmul.f32 %v846, %v850
        %v856 = vmul.f32 %v845, %v854
        %857 = vst [vmem:[#allocation2 + $0x90] sm:$0xff] %v855
        %858 = vst [vmem:[#allocation2 + $0x98] sm:$0xff] %v856
        %859 = vrot.lane.b32.xlu0 %v659, 4
        %v860 = vpop.permute.xlu0 %859
        %861 = vrot.lane.b32.xlu0 %v660, 4
        %v862 = vpop.permute.xlu0 %861
        %vm863 = vcmp.lt.s32.totalorder %v335, 4
        %v864 = vsel %vm863, %v860, %v862
        %v865 = vsel %vm863, %v862, %v860
        %v866 = vlaneseq
        %v867 = vshrl.u32 %v866, 7
        %v868 = vsub.s32 2, %v867
        %v869 = vrot.slane %v663, %v868
        %v870 = vlaneseq
        %v871 = vshrl.u32 %v870, 7
        %v872 = vsub.s32 2, %v871
        %v873 = vrot.slane %v664, %v872
        %v874 = vmul.f32 %v865, %v869
        %v875 = vmul.f32 %v864, %v873
        %876 = vst [vmem:[#allocation2 + $0xa0] sm:$0xff] %v874
        %877 = vst [vmem:[#allocation2 + $0xa8] sm:$0xff] %v875
        %878 = vrot.lane.b32.xlu0 %v659, 2
        %v879 = vpop.permute.xlu0 %878
        %880 = vrot.lane.b32.xlu0 %v660, 2
        %v881 = vpop.permute.xlu0 %880
        %vm882 = vcmp.lt.s32.totalorder %v335, 2
        %v883 = vsel %vm882, %v879, %v881
        %v884 = vsel %vm882, %v881, %v879
        %v885 = vlaneseq
        %v886 = vshrl.u32 %v885, 7
        %v887 = vsub.s32 3, %v886
        %v888 = vrot.slane %v663, %v887
        %v889 = vlaneseq
        %v890 = vshrl.u32 %v889, 7
        %v891 = vsub.s32 3, %v890
        %v892 = vrot.slane %v664, %v891
        %v893 = vmul.f32 %v884, %v888
        %v894 = vmul.f32 %v883, %v892
        %895 = vst [vmem:[#allocation2 + $0xb0] sm:$0xff] %v893
        %896 = vst [vmem:[#allocation2 + $0xb8] sm:$0xff] %v894
        %897 = vst [vmem:[#allocation2 + $0xc0] sm:$0xff] %v659
        %898 = vst [vmem:[#allocation2 + $0xc8] sm:$0xff] %v660
        %899 = vrot.lane.b32.xlu0 %v659, 126
        %v900 = vpop.permute.xlu0 %899
        %901 = vrot.lane.b32.xlu0 %v660, 126
        %v902 = vpop.permute.xlu0 %901
        %vm903 = vcmp.lt.s32.totalorder %v335, 126
        %v904 = vsel %vm903, %v900, %v902
        %v905 = vsel %vm903, %v902, %v900
        %v906 = vlaneseq
        %v907 = vshrl.u32 %v906, 7
        %v908 = vsub.s32 5, %v907
        %v909 = vrot.slane %v663, %v908
        %v910 = vlaneseq
        %v911 = vshrl.u32 %v910, 7
        %v912 = vsub.s32 5, %v911
        %v913 = vrot.slane %v664, %v912
        %v914 = vmul.f32 %v904, %v909
        %v915 = vmul.f32 %v905, %v913
        %916 = vst [vmem:[#allocation2 + $0xd0] sm:$0xff] %v914
        %917 = vst [vmem:[#allocation2 + $0xd8] sm:$0xff] %v915
        %918 = vrot.lane.b32.xlu0 %v659, 124
        %v919 = vpop.permute.xlu0 %918
        %920 = vrot.lane.b32.xlu0 %v660, 124
        %v921 = vpop.permute.xlu0 %920
        %vm922 = vcmp.lt.s32.totalorder %v335, 124
        %v923 = vsel %vm922, %v919, %v921
        %v924 = vsel %vm922, %v921, %v919
        %v925 = vlaneseq
        %v926 = vshrl.u32 %v925, 7
        %v927 = vsub.s32 6, %v926
        %v928 = vrot.slane %v663, %v927
        %v929 = vlaneseq
        %v930 = vshrl.u32 %v929, 7
        %v931 = vsub.s32 6, %v930
        %v932 = vrot.slane %v664, %v931
        %v933 = vmul.f32 %v923, %v928
        %v934 = vmul.f32 %v924, %v932
        %935 = vst [vmem:[#allocation2 + $0xe0] sm:$0xff] %v933
        %936 = vst [vmem:[#allocation2 + $0xe8] sm:$0xff] %v934
        %937 = vrot.lane.b32.xlu0 %v659, 100
        %v938 = vpop.permute.xlu0 %937
        %939 = vrot.lane.b32.xlu0 %v660, 100
        %v940 = vpop.permute.xlu0 %939
        %vm941 = vcmp.lt.s32.totalorder %v335, 100
        %v942 = vsel %vm941, %v938, %v940
        %v943 = vsel %vm941, %v940, %v938
        %v944 = vlaneseq
        %v945 = vshrl.u32 %v944, 7
        %v946 = vsub.s32 7, %v945
        %v947 = vrot.slane %v663, %v946
        %v948 = vlaneseq
        %v949 = vshrl.u32 %v948, 7
        %v950 = vsub.s32 7, %v949
        %v951 = vrot.slane %v664, %v950
        %v952 = vmul.f32 %v942, %v947
        %v953 = vmul.f32 %v943, %v951
        %954 = vst [vmem:[#allocation2 + $0xf0] sm:$0xff] %v952
        %955 = vst [vmem:[#allocation2 + $0xf8] sm:$0xff] %v953
        %956 = vrot.lane.b32.xlu0 %v659, 98
        %v957 = vpop.permute.xlu0 %956
        %958 = vrot.lane.b32.xlu0 %v660, 98
        %v959 = vpop.permute.xlu0 %958
        %vm960 = vcmp.lt.s32.totalorder %v335, 98
        %v961 = vsel %vm960, %v957, %v959
        %v962 = vsel %vm960, %v959, %v957
        %v963 = vlaneseq
        %v964 = vshrl.u32 %v963, 7
        %v965 = vsub.s32 0, %v964
        %v966 = vrot.slane %v665, %v965
        %v967 = vlaneseq
        %v968 = vshrl.u32 %v967, 7
        %v969 = vsub.s32 0, %v968
        %v970 = vrot.slane %v666, %v969
        %v971 = vmul.f32 %v961, %v966
        %v972 = vmul.f32 %v962, %v970
        %973 = vst [vmem:[#allocation2 + $0x100] sm:$0xff] %v971
        %974 = vst [vmem:[#allocation2 + $0x108] sm:$0xff] %v972
        %975 = vrot.lane.b32.xlu0 %v659, 96
        %v976 = vpop.permute.xlu0 %975
        %977 = vrot.lane.b32.xlu0 %v660, 96
        %v978 = vpop.permute.xlu0 %977
        %vm979 = vcmp.lt.s32.totalorder %v335, 96
        %v980 = vsel %vm979, %v976, %v978
        %v981 = vsel %vm979, %v978, %v976
        %v982 = vlaneseq
        %v983 = vshrl.u32 %v982, 7
        %v984 = vsub.s32 1, %v983
        %v985 = vrot.slane %v665, %v984
        %v986 = vlaneseq
        %v987 = vshrl.u32 %v986, 7
        %v988 = vsub.s32 1, %v987
        %v989 = vrot.slane %v666, %v988
        %v990 = vmul.f32 %v980, %v985
        %v991 = vmul.f32 %v981, %v989
        %992 = vst [vmem:[#allocation2 + $0x110] sm:$0xff] %v990
        %993 = vst [vmem:[#allocation2 + $0x118] sm:$0xff] %v991
        %994 = vrot.lane.b32.xlu0 %v659, 94
        %v995 = vpop.permute.xlu0 %994
        %996 = vrot.lane.b32.xlu0 %v660, 94
        %v997 = vpop.permute.xlu0 %996
        %vm998 = vcmp.lt.s32.totalorder %v335, 94
        %v999 = vsel %vm998, %v995, %v997
        %v1000 = vsel %vm998, %v997, %v995
        %v1001 = vlaneseq
        %v1002 = vshrl.u32 %v1001, 7
        %v1003 = vsub.s32 2, %v1002
        %v1004 = vrot.slane %v665, %v1003
        %v1005 = vlaneseq
        %v1006 = vshrl.u32 %v1005, 7
        %v1007 = vsub.s32 2, %v1006
        %v1008 = vrot.slane %v666, %v1007
        %v1009 = vmul.f32 %v999, %v1004
        %v1010 = vmul.f32 %v1000, %v1008
        %1011 = vst [vmem:[#allocation2 + $0x120] sm:$0xff] %v1009
        %1012 = vst [vmem:[#allocation2 + $0x128] sm:$0xff] %v1010
        %1013 = vrot.lane.b32.xlu0 %v659, 92
        %v1014 = vpop.permute.xlu0 %1013
        %1015 = vrot.lane.b32.xlu0 %v660, 92
        %v1016 = vpop.permute.xlu0 %1015
        %vm1017 = vcmp.lt.s32.totalorder %v335, 92
        %v1018 = vsel %vm1017, %v1014, %v1016
        %v1019 = vsel %vm1017, %v1016, %v1014
        %v1020 = vlaneseq
        %v1021 = vshrl.u32 %v1020, 7
        %v1022 = vsub.s32 3, %v1021
        %v1023 = vrot.slane %v665, %v1022
        %v1024 = vlaneseq
        %v1025 = vshrl.u32 %v1024, 7
        %v1026 = vsub.s32 3, %v1025
        %v1027 = vrot.slane %v666, %v1026
        %v1028 = vmul.f32 %v1018, %v1023
        %v1029 = vmul.f32 %v1019, %v1027
        %1030 = vst [vmem:[#allocation2 + $0x130] sm:$0xff] %v1028
        %1031 = vst [vmem:[#allocation2 + $0x138] sm:$0xff] %v1029
        %v1032 = vlaneseq
        %v1033 = vshrl.u32 %v1032, 7
        %v1034 = vsub.s32 4, %v1033
        %v1035 = vrot.slane %v665, %v1034
        %v1036 = vlaneseq
        %v1037 = vshrl.u32 %v1036, 7
        %v1038 = vsub.s32 4, %v1037
        %v1039 = vrot.slane %v666, %v1038
        %v1040 = vmul.f32 %v674, %v1035
        %v1041 = vmul.f32 %v675, %v1039
        %1042 = vst [vmem:[#allocation2 + $0x140] sm:$0xff] %v1040
        %1043 = vst [vmem:[#allocation2 + $0x148] sm:$0xff] %v1041
        %v1044 = vlaneseq
        %v1045 = vshrl.u32 %v1044, 7
        %v1046 = vsub.s32 5, %v1045
        %v1047 = vrot.slane %v665, %v1046
        %v1048 = vlaneseq
        %v1049 = vshrl.u32 %v1048, 7
        %v1050 = vsub.s32 5, %v1049
        %v1051 = vrot.slane %v666, %v1050
        %v1052 = vmul.f32 %v693, %v1047
        %v1053 = vmul.f32 %v694, %v1051
        %1054 = vst [vmem:[#allocation2 + $0x150] sm:$0xff] %v1052
        %1055 = vst [vmem:[#allocation2 + $0x158] sm:$0xff] %v1053
        %v1056 = vlaneseq
        %v1057 = vshrl.u32 %v1056, 7
        %v1058 = vsub.s32 6, %v1057
        %v1059 = vrot.slane %v665, %v1058
        %v1060 = vlaneseq
        %v1061 = vshrl.u32 %v1060, 7
        %v1062 = vsub.s32 6, %v1061
        %v1063 = vrot.slane %v666, %v1062
        %v1064 = vmul.f32 %v712, %v1059
        %v1065 = vmul.f32 %v713, %v1063
        %1066 = vst [vmem:[#allocation2 + $0x160] sm:$0xff] %v1064
        %1067 = vst [vmem:[#allocation2 + $0x168] sm:$0xff] %v1065
        %v1068 = vlaneseq
        %v1069 = vshrl.u32 %v1068, 7
        %v1070 = vsub.s32 7, %v1069
        %v1071 = vrot.slane %v665, %v1070
        %v1072 = vlaneseq
        %v1073 = vshrl.u32 %v1072, 7
        %v1074 = vsub.s32 7, %v1073
        %v1075 = vrot.slane %v666, %v1074
        %v1076 = vmul.f32 %v731, %v1071
        %v1077 = vmul.f32 %v732, %v1075
        %1078 = vst [vmem:[#allocation2 + $0x170] sm:$0xff] %v1076
        %1079 = vst [vmem:[#allocation2 + $0x178] sm:$0xff] %v1077
        %v1080 = vlaneseq
        %v1081 = vshrl.u32 %v1080, 7
        %v1082 = vsub.s32 0, %v1081
        %v1083 = vrot.slane %v667, %v1082
        %v1084 = vlaneseq
        %v1085 = vshrl.u32 %v1084, 7
        %v1086 = vsub.s32 0, %v1085
        %v1087 = vrot.slane %v668, %v1086
        %v1088 = vmul.f32 %v750, %v1083
        %v1089 = vmul.f32 %v751, %v1087
        %1090 = vst [vmem:[#allocation2 + $0x180] sm:$0xff] %v1088
        %1091 = vst [vmem:[#allocation2 + $0x188] sm:$0xff] %v1089
        %v1092 = vld [vmem:[%s4] sm:$0xff]
        %v1093 = vld [vmem:[%s4 + $0x8] sm:$0xff]
        %v1094 = vld [vmem:[#allocation2] sm:$0xff]
        %v1095 = vld [vmem:[#allocation2 + $0x8] sm:$0xff]
        %v1096 = vld [vmem:[#allocation2 + $0x10] sm:$0xff]
        %v1097 = vld [vmem:[#allocation2 + $0x18] sm:$0xff]
        %v1098 = vld [vmem:[#allocation2 + $0x20] sm:$0xff]
        %v1099 = vld [vmem:[#allocation2 + $0x28] sm:$0xff]
        %v1100 = vld [vmem:[#allocation2 + $0x30] sm:$0xff]
        %v1101 = vld [vmem:[#allocation2 + $0x38] sm:$0xff]
        %v1102 = vld [vmem:[#allocation2 + $0x40] sm:$0xff]
        %v1103 = vld [vmem:[#allocation2 + $0x48] sm:$0xff]
        %v1104 = vld [vmem:[#allocation2 + $0x50] sm:$0xff]
        %v1105 = vld [vmem:[#allocation2 + $0x58] sm:$0xff]
        %v1106 = vld [vmem:[#allocation2 + $0x60] sm:$0xff]
        %v1107 = vld [vmem:[#allocation2 + $0x68] sm:$0xff]
        %v1108 = vld [vmem:[#allocation2 + $0x70] sm:$0xff]
        %v1109 = vld [vmem:[#allocation2 + $0x78] sm:$0xff]
        %v1110 = vld [vmem:[#allocation2 + $0x80] sm:$0xff]
        %v1111 = vld [vmem:[#allocation2 + $0x88] sm:$0xff]
        %v1112 = vld [vmem:[#allocation2 + $0x90] sm:$0xff]
        %v1113 = vld [vmem:[#allocation2 + $0x98] sm:$0xff]
        %v1114 = vld [vmem:[#allocation2 + $0xa0] sm:$0xff]
        %v1115 = vld [vmem:[#allocation2 + $0xa8] sm:$0xff]
        %v1116 = vld [vmem:[#allocation2 + $0xb0] sm:$0xff]
        %v1117 = vld [vmem:[#allocation2 + $0xb8] sm:$0xff]
        %v1118 = vld [vmem:[#allocation2 + $0xc0] sm:$0xff]
        %v1119 = vld [vmem:[#allocation2 + $0xc8] sm:$0xff]
        %v1120 = vld [vmem:[#allocation2 + $0xd0] sm:$0xff]
        %v1121 = vld [vmem:[#allocation2 + $0xd8] sm:$0xff]
        %v1122 = vld [vmem:[#allocation2 + $0xe0] sm:$0xff]
        %v1123 = vld [vmem:[#allocation2 + $0xe8] sm:$0xff]
        %v1124 = vld [vmem:[#allocation2 + $0xf0] sm:$0xff]
        %v1125 = vld [vmem:[#allocation2 + $0xf8] sm:$0xff]
        %v1126 = vld [vmem:[#allocation2 + $0x100] sm:$0xff]
        %v1127 = vld [vmem:[#allocation2 + $0x108] sm:$0xff]
        %v1128 = vld [vmem:[#allocation2 + $0x110] sm:$0xff]
        %v1129 = vld [vmem:[#allocation2 + $0x118] sm:$0xff]
        %v1130 = vld [vmem:[#allocation2 + $0x120] sm:$0xff]
        %v1131 = vld [vmem:[#allocation2 + $0x128] sm:$0xff]
        %v1132 = vld [vmem:[#allocation2 + $0x130] sm:$0xff]
        %v1133 = vld [vmem:[#allocation2 + $0x138] sm:$0xff]
        %v1134 = vld [vmem:[#allocation2 + $0x140] sm:$0xff]
        %v1135 = vld [vmem:[#allocation2 + $0x148] sm:$0xff]
        %v1136 = vld [vmem:[#allocation2 + $0x150] sm:$0xff]
        %v1137 = vld [vmem:[#allocation2 + $0x158] sm:$0xff]
        %v1138 = vld [vmem:[#allocation2 + $0x160] sm:$0xff]
        %v1139 = vld [vmem:[#allocation2 + $0x168] sm:$0xff]
        %v1140 = vld [vmem:[#allocation2 + $0x170] sm:$0xff]
        %v1141 = vld [vmem:[#allocation2 + $0x178] sm:$0xff]
        %v1142 = vld [vmem:[#allocation2 + $0x180] sm:$0xff]
        %v1143 = vld [vmem:[#allocation2 + $0x188] sm:$0xff]
        %v1144 = vld [vmem:[%s5] sm:$0xff]
        %1146 = vset.pattern.permute.xlu0 0
        %1147 = vperm.xlu0 %1146, %v1144
        %v1148 = vpop.permute.xlu0 %1147
        %v1151 = vsel %vm511, %v1093, 0
        %1153 = vmatprep.subr.mxu0 %v1095
        %1154 = vmatpush1.msra.mxu0 %v1094
        %1155 = vmatprep.subr.mxu0 %v1097
        %1156 = vmatpush1.msra.mxu0 %v1096
        %1157 = vmatprep.subr.mxu0 %v1099
        %1158 = vmatpush1.msra.mxu0 %v1098
        %1159 = vmatprep.subr.mxu0 %v1101
        %1160 = vmatpush1.msra.mxu0 %v1100
        %1161 = vmatprep.subr.mxu0 %v1103
        %1162 = vmatpush1.msra.mxu0 %v1102
        %1163 = vmatprep.subr.mxu0 %v1105
        %1164 = vmatpush1.msra.mxu0 %v1104
        %1165 = vmatprep.subr.mxu0 %v1107
        %1166 = vmatpush1.msra.mxu0 %v1106
        %1167 = vmatprep.subr.mxu0 %v1109
        %1168 = vmatpush1.msra.mxu0 %v1108
        %1169 = vmatprep.subr.mxu0 %v1111
        %1170 = vmatpush1.msra.mxu0 %v1110
        %1171 = vmatprep.subr.mxu0 %v1113
        %1172 = vmatpush1.msra.mxu0 %v1112
        %1173 = vmatprep.subr.mxu0 %v1115
        %1174 = vmatpush1.msra.mxu0 %v1114
        %1175 = vmatprep.subr.mxu0 %v1117
        %1176 = vmatpush1.msra.mxu0 %v1116
        %1177 = vmatprep.subr.mxu0 %v1119
        %1178 = vmatpush1.msra.mxu0 %v1118
        %1179 = vmatprep.subr.mxu0 %v1121
        %1180 = vmatpush1.msra.mxu0 %v1120
        %1181 = vmatprep.subr.mxu0 %v1123
        %1182 = vmatpush1.msra.mxu0 %v1122
        %1183 = vmatprep.subr.mxu0 %v1125
        %1184 = vmatpush1.msra.mxu0 %v1124
        %1185 = vmatprep.subr.mxu0 %v1127
        %1186 = vmatpush1.msra.mxu0 %v1126
        %1187 = vmatprep.subr.mxu0 %v1129
        %1188 = vmatpush1.msra.mxu0 %v1128
        %1189 = vmatprep.subr.mxu0 %v1131
        %1190 = vmatpush1.msra.mxu0 %v1130
        %1191 = vmatprep.subr.mxu0 %v1133
        %1192 = vmatpush1.msra.mxu0 %v1132
        %1193 = vmatprep.subr.mxu0 %v1135
        %1194 = vmatpush1.msra.mxu0 %v1134
        %1195 = vmatprep.subr.mxu0 %v1137
        %1196 = vmatpush1.msra.mxu0 %v1136
        %1197 = vmatprep.subr.mxu0 %v1139
        %1198 = vmatpush1.msra.mxu0 %v1138
        %1199 = vmatprep.subr.mxu0 %v1141
        %1200 = vmatpush1.msra.mxu0 %v1140
        %1201 = vmatprep.subr.mxu0 %v1143
        %1202 = vmatpush1.msra.mxu0 %v1142
        %1203 = vmatprep.subr.mxu0 0.0
        %1204 = vmatpush1.msra.mxu0 0.0
        %1205 = vmatprep.subr.mxu0 0.0
        %1206 = vmatpush1.msra.mxu0 0.0
        %1207 = vmatprep.subr.mxu0 0.0
        %1208 = vmatpush1.msra.mxu0 0.0
        %1209 = vmatprep.subr.mxu0 0.0
        %1210 = vmatpush1.msra.mxu0 0.0
        %1211 = vmatprep.subr.mxu0 0.0
        %1212 = vmatpush1.msra.mxu0 0.0
        %1213 = vmatprep.subr.mxu0 0.0
        %1214 = vmatpush1.msra.mxu0 0.0
        %1215 = vmatprep.subr.mxu0 0.0
        %1216 = vmatpush1.msra.mxu0 0.0
        %1217 = vmatprep.mubr.f32.mxu0 %v1151
        %1218 = vmatmul.mubr.f32.gmra.mrb[0].mxu0 %v1092
        %v1219 = vpop.f32.mrb[0].mxu0
        %v1220 = vadd.f32 %v1148, %v1219
        %v1221 = vpop.f32.mrb[0].mxu0
        %v1222 = vadd.f32 %v1148, %v1221
        %1223 = vdwg.mxu0
        %v1224 = vadd.f32 %v1220, %v1222
        %1225 = vadd.xlane.f32.xlu0 %v1224
        %v1226 = vpop.xlane.xlu0 %1225
        %v1227 = vmul.f32 %v1226, %v589
        %v1228 = vsub.f32 %v1220, %v1227
        %v1229 = vsub.f32 %v1222, %v1227
        %v1230 = vmul.f32 %v1228, %v1228
        %v1231 = vmul.f32 %v1229, %v1229
        %v1232 = vadd.f32 %v1230, %v1231
        %1233 = vadd.xlane.f32.xlu0 %v1232
        %v1234 = vpop.xlane.xlu0 %1233
        %v1235 = vmul.f32 %v1234, %v589
        %v1236 = vadd.f32 %v1235, 1e-05
        %v1237 = vrsqrt.pop %v1236
        %v1238 = vmul.f32 %v1228, %v1237
        %v1239 = vmul.f32 %v1229, %v1237
        %v1240 = vadd.f32 %v1238, %v324
        %v1241 = vadd.f32 %v1239, %v325
        %v1242 = vmul.f32 %v1240, 0.70710677
        %v1243 = vmul.f32 %v1241, 0.70710677
        %v1244 = vand.u32 2147483647, %v1242
        %v1245 = vand.u32 2147483647, %v1243
        %v1246 = vmul.f32 %v1244, 0.3275911
        %v1247 = vmul.f32 %v1245, 0.3275911
        %v1248 = vadd.f32 %v1246, 1.0
        %v1249 = vadd.f32 %v1247, 1.0
        %v1250 = vrcp.pop %v1248
        %v1251 = vrcp.pop %v1249
        %v1252 = vmul.f32 %v1248, %v1250
        %v1253 = vmul.f32 %v1249, %v1251
        %v1254 = vsub.f32 2.0, %v1252
        %v1255 = vsub.f32 2.0, %v1253
        %v1256 = vmul.f32 %v1250, %v1254
        %v1257 = vmul.f32 %v1251, %v1255
        %v1258 = vmul.f32 %v1256, 1.0614054
        %v1259 = vmul.f32 %v1257, 1.0614054
        %v1260 = vadd.f32 %v1258, -1.4531521
        %v1261 = vadd.f32 %v1259, -1.4531521
        %v1262 = vmul.f32 %v1256, %v1260
        %v1263 = vmul.f32 %v1257, %v1261
        %v1264 = vadd.f32 %v1262, 1.4214138
        %v1265 = vadd.f32 %v1263, 1.4214138
        %v1266 = vmul.f32 %v1256, %v1264
        %v1267 = vmul.f32 %v1257, %v1265
        %v1268 = vadd.f32 %v1266, -0.28449672
        %v1269 = vadd.f32 %v1267, -0.28449672
        %v1270 = vmul.f32 %v1256, %v1268
        %v1271 = vmul.f32 %v1257, %v1269
        %v1272 = vadd.f32 %v1270, 0.2548296
        %v1273 = vadd.f32 %v1271, 0.2548296
        %v1274 = vmul.f32 %v1256, %v1272
        %v1275 = vmul.f32 %v1257, %v1273
        %v1276 = vsub.f32 0.0, %v1244
        %v1277 = vsub.f32 0.0, %v1245
        %v1278 = vmul.f32 %v1276, %v1244
        %v1279 = vmul.f32 %v1277, %v1245
        %v1280 = vmul.f32 %v1278, 1.442695
        %v1281 = vpow.pop %v1280
        %v1282 = vmul.f32 %v1279, 1.442695
        %v1283 = vpow.pop %v1282
        %v1284 = vmul.f32 %v1274, %v1281
        %v1285 = vmul.f32 %v1275, %v1283
        %v1286 = vsub.f32 1.0, %v1284
        %v1287 = vsub.f32 1.0, %v1285
        %vm1288 = vcmp.ge.f32.partialorder %v1242, 0.0
        %vm1289 = vcmp.ge.f32.partialorder %v1243, 0.0
        %v1290 = vsub.f32 0.0, %v1286
        %v1291 = vsub.f32 0.0, %v1287
        %v1292 = vsel %vm1288, %v1286, %v1290
        %v1293 = vsel %vm1289, %v1287, %v1291
        %v1294 = vmul.f32 %v1240, 0.5
        %v1295 = vmul.f32 %v1241, 0.5
        %v1296 = vadd.f32 %v1292, 1.0
        %v1297 = vadd.f32 %v1293, 1.0
        %v1298 = vmul.f32 %v1294, %v1296
        %v1299 = vmul.f32 %v1295, %v1297
        %1300 = vst [vmem:[%s323] sm:$0xff] %v1298
        %1301 = vst [vmem:[%s323 + $0x8] sm:$0xff] %v1299
        %s1302 = sand.u32 %s185, 1
        %s1303 = scalar_lea.sflag [#allocation5], %s1302
        %s1304 = sand.u32 %s185, 1
        %s1305 = smul.addr %s1304, 16
        %s1306 = scalar_lea.vmem [#allocation9], %s1305
        // Predicated region
        $region61: #{tpu_custom_call.1} parent=47 // pred_check
          %p1307 = pneg %p195
        $region62: #{tpu_custom_call.1} parent=47 // pred_check_branch
          %1309 = sbr.rel (%p1307) target = $region64
        $region63: #{tpu_custom_call.1} parent=47 // pred_region
          %s1311 = ssub.s32 256, 256
          %1312 = vsyncadd %s1303, %s1311
          %s1313 = smul.addr %s25, 2
          %s1314 = smul.addr %s1313, 128
          %s1315 = scalar_lea.hbm %s7, %s1314
          %s1317 = sshll.u32 %s1306, 4
          %s1318 = int_to_ptr.vmem [resolvable:$true] %s1317
          %1320 = dma.vmem_to_hbm [thread:$0]  %s1318, 256, %s1315, %s1303
        $region64: #{tpu_custom_call.1} parent=47 // pred_fallthru
          _
      $region48: #{tpu_custom_call.1} parent=5 // pred_fallthru
        _
      %p1321 = scmp.le.s32.totalorder 2, %s20
      // Predicated region
      $region65: #{tpu_custom_call.1} parent=5 // pred_check
        %p1322 = pneg %p1321
      $region66: #{tpu_custom_call.1} parent=5 // pred_check_branch
        %1324 = sbr.rel (%p1322) target = $region68
      $region67: #{tpu_custom_call.1} parent=5 // pred_region
        %s1325 = ssub.s32 %s20, 2
        // Predicated region
        $region69: #{tpu_custom_call.1} parent=67 // pred_check
          %p1326 = pneg %p201
        $region70: #{tpu_custom_call.1} parent=67 // pred_check_branch
          %1328 = sbr.rel (%p1326) target = $region72
        $region71: #{tpu_custom_call.1} parent=67 // pred_region
          %s1329 = sand.u32 %s186, 1
          %s1330 = scalar_lea.sflag [#allocation5], %s1329
          %s1331 = sand.u32 %s186, 1
          %s1332 = smul.addr %s1331, 16
          %s1333 = scalar_lea.vmem [#allocation9], %s1332
          %1334 = dma.done %s1330, 256
        $region72: #{tpu_custom_call.1} parent=67 // pred_fallthru
          _
      $region68: #{tpu_custom_call.1} parent=5 // pred_fallthru
        _
    $region6: #{tpu_custom_call.1} parent=1 // loop_footer
      %s24 = sadd.s32 1, %s20
    $region7: #{tpu_custom_call.1} parent=1 // loop_footer_branch
      %19 = sbr.rel target = $region3
    $region8: #{tpu_custom_call.1} parent=1 // loop_exit
      _
    %1335 = vsyncpa [#allocation4], 1
    %s1336 = scalar_lea.sflag [#allocation4], 1
    %1337 = vsyncpa %s1336, 1
    %1338 = vsyncpa [#allocation7], 1
    %1339 = vsyncpa [#allocation5], 1
    %s1340 = scalar_lea.sflag [#allocation5], 1
    %1341 = vsyncpa %s1340, 1

</llo_original>
